<compile_context>
chip_gen: v6e
topology: v6e:2x2x1
jax: 0.10.0
libtpu: 0.0.40
codegen_flags: <defaults>
</compile_context>

<pallas_src>
import jax
import jax.numpy as jnp
from jax import lax
from jax.experimental import pallas as pl
from jax.experimental.pallas import tpu as pltpu

EMBEDDING_DIM = 32
VOCAB_LEN = 50
PAD = 1


# --------------------------- fused forward kernel ---------------------------
def _make_fused_kernel(B, M, N, E, Vpad):
    T = B                      # LSTM recurrence length (dim 0 of embeddings)
    Nbt = M + N                # LSTM "batch": q rows ++ a rows, run together
    Nrows = T * Nbt
    BN = B * N
    E2, E4, E8 = 2 * E, 4 * E, 8 * E

    def kernel(tok_ref, emb_ref, wih_ref, whh_ref, wg_ref, w_ref, wc_ref,
               wf1_ref, small_ref, out_ref):
        f32 = jnp.float32

        # ---- packed small params: one (8, 4E) tile, single DMA ----
        small = small_ref[...]
        b_f = small[0:1, :]                    # (1, 4E) LSTM bias, forward
        b_r = small[1:2, :]                    # (1, 4E) LSTM bias, reverse
        bg = small[2:3, :E2]                   # (1, 2E)
        bw = small[3:4, :]                     # (1, 4E)
        cb = small[4:5, :]                     # (1, 4E) conv bias
        bf1 = small[5:6, :E]                   # (1, E)
        wf2 = small[6:7, :E]                   # (1, E)  final-layer weight row
        bf2 = small[7:8, 0:1]                  # (1, 1)

        # ---- embedding gather folded in: one-hot @ (Vpad, E) table ----
        tok = tok_ref[...]                                        # (Nrows, 1)
        onehot = (tok == lax.broadcasted_iota(jnp.int32, (Nrows, Vpad), 1)
                  ).astype(f32)                                   # (Nrows, Vpad)
        x2d = jnp.dot(onehot, emb_ref[...],
                      preferred_element_type=f32)                 # (Nrows, E)

        # ---- BiLSTM: time-invariant input projection hoisted out ----
        gx = jnp.dot(x2d, wih_ref[...],
                     preferred_element_type=f32)                  # (Nrows, 8E)
        whh = whh_ref[...]                                        # (E, 8E)
        whh_f, whh_r = whh[:, :E4], whh[:, E4:]                   # (E, 4E) each

        def cell(gates, c):                    # PyTorch gate order i, f, g, o
            sg = jax.nn.sigmoid(gates)         # one full-tile EUP pass
            th = jnp.tanh(gates)               # one full-tile EUP pass
            i, f, o = sg[:, :E], sg[:, E:E2], sg[:, 3 * E:]
            g = th[:, E2:3 * E]
            c_new = f * c + i * g
            return o * jnp.tanh(c_new), c_new

        h_f = h_r = None                       # zero initial state
        c_f = jnp.zeros((Nbt, E), f32)
        c_r = jnp.zeros((Nbt, E), f32)
        outs_f = [None] * T
        outs_r = [None] * T
        for t in range(T):                     # tiny static T -> fully unrolled
            tr = T - 1 - t                     # reverse dir indexed backwards
            pre_f = gx[t * Nbt:(t + 1) * Nbt, :E4] + b_f
            if h_f is not None:
                pre_f = pre_f + jnp.dot(h_f, whh_f, preferred_element_type=f32)
            h_f, c_f = cell(pre_f, c_f)
            outs_f[t] = h_f

            pre_r = gx[tr * Nbt:(tr + 1) * Nbt, E4:] + b_r
            if h_r is not None:
                pre_r = pre_r + jnp.dot(h_r, whh_r, preferred_element_type=f32)
            h_r, c_r = cell(pre_r, c_r)
            outs_r[tr] = h_r

        # ---- single (Nrows, 2E) "bar" tensor; q/a never leave VMEM ----
        bar = jnp.concatenate([jnp.concatenate(outs_f, axis=0),
                               jnp.concatenate(outs_r, axis=0)], axis=-1)
        bar3 = bar.reshape(B, Nbt, E2)
        q_bar = bar3[:, :M, :]                 # (B, M, 2E)
        a_bar = bar3[:, M:, :]                 # (B, N, 2E)

        # ---- attention, batched over B (flash-style einsum patterns) ----
        wgq = jnp.dot(bar, wg_ref[...], preferred_element_type=f32) + bg
        wgq3 = wgq.reshape(B, Nbt, E2)[:, :M, :]                  # (B, M, 2E)
        # sT[b,n,m] = <a_bar[b,n,:], wgq[b,m,:]>  (== scores transposed)
        sT = jnp.einsum('bne,bme->bnm', a_bar, wgq3,
                        preferred_element_type=f32)               # (B, N, M)
        sT = sT - jnp.max(sT, axis=1, keepdims=True)              # softmax over n
        p = jnp.exp(sT)
        gT = p / jnp.sum(p, axis=1, keepdims=True)                # (B, N, M)
        h = jnp.einsum('bnm,bme->bne', gT, q_bar,
                       preferred_element_type=f32)                # (B, N, 2E)

        # ---- compare + Linear/ReLU (W split in halves -> no lane concat) ----
        d = a_bar - h
        dd = (d * d).reshape(BN, E2)
        prod = (a_bar * h).reshape(BN, E2)
        w1 = w_ref[:E2, :]                                        # (2E, 4E)
        w2 = w_ref[E2:, :]                                        # (2E, 4E)
        tmat = jnp.maximum(
            jnp.dot(dd, w1, preferred_element_type=f32)
            + jnp.dot(prod, w2, preferred_element_type=f32) + bw, 0.0)  # (BN, 4E)

        # ---- Conv1d(k=3, pad=1): one stacked matmul + masked global shifts ----
        r = jnp.dot(tmat, wc_ref[...], preferred_element_type=f32)      # (BN, 12E)
        r0, r1, r2 = r[:, :E4], r[:, E4:E8], r[:, E8:]
        zrow = jnp.zeros((1, E4), f32)
        row = lax.broadcasted_iota(jnp.int32, (BN, 1), 0)
        s0 = jnp.where(row % N == 0, 0.0,                         # tap t[n-1]
                       jnp.concatenate([zrow, r0[:BN - 1, :]], axis=0))
        s2 = jnp.where(row % N == N - 1, 0.0,                     # tap t[n+1]
                       jnp.concatenate([r2[1:, :], zrow], axis=0))
        o = cb + r1 + s0 + s2                                     # (BN, 4E)
        pooled = jnp.max(o.reshape(B, N, E4), axis=1)             # (B, 4E)

        # ---- final MLP, batched over B ----
        f1 = jnp.maximum(
            jnp.dot(pooled, wf1_ref[...], preferred_element_type=f32) + bf1,
            0.0)                                                  # (B, E)
        f2 = lax.dot_general(wf2, f1, (((1,), (1,)), ((), ())),
                             preferred_element_type=f32) + bf2    # (1, B)

        # lane-dense output: B scalars in the first lanes of a (1, 4E) row
        out_ref[...] = jnp.concatenate([f2, jnp.zeros((1, E4 - B), f32)],
                                       axis=-1)

    return kernel


# ------------------------------- wrappers ------------------------------------
def pack_params(p, E=EMBEDDING_DIM):
    """One-time packing: pre-transposed / stacked, kernel-friendly blocks."""
    L = p["lstm"]
    E4 = 4 * E
    Vpad = -(-VOCAB_LEN // 64) * 64           # pad vocab to 64 sublanes

    def row(v):
        v = jnp.reshape(v, (1, -1)).astype(jnp.float32)
        return jnp.pad(v, ((0, 0), (0, E4 - v.shape[1])))

    return dict(
        emb=jnp.pad(p["emb"].astype(jnp.float32),
                    ((0, Vpad - VOCAB_LEN), (0, 0))),                 # (Vpad, E)
        wih_t=jnp.concatenate([L["w_ih_f"], L["w_ih_r"]], axis=0).T,  # (E, 8E)
        whh_t=jnp.concatenate([L["w_hh_f"], L["w_hh_r"]], axis=0).T,  # (E, 8E)
        wg_t=p["wg"].T,                                               # (2E, 2E)
        w_t=p["w"].T,                                                 # (4E, 4E)
        wc_t=jnp.concatenate([p["c0"], p["c1"], p["c2"]], axis=0).T,  # (4E, 12E)
        wf1_t=p["wf1"].T,                                             # (4E, E)
        small=jnp.concatenate(
            [row(L["b_f"]), row(L["b_r"]), row(p["bg"]), row(p["bw"]),
             row(p["cb"]), row(p["bf1"]), row(p["wf2"]), row(p["bf2"])],
            axis=0),                                                  # (8, 4E)
    )


def compagg_forward(packed, x1, x2):
    E = EMBEDDING_DIM
    B, M = x1.shape
    _, N = x2.shape
    Vpad = packed["emb"].shape[0]
    # token ids only -- the embedding gather happens inside the kernel
    toks = jnp.concatenate([x1, x2], axis=1).reshape(B * (M + N), 1)
    toks = toks.astype(jnp.int32)

    operands = (toks, packed["emb"], packed["wih_t"], packed["whh_t"],
                packed["wg_t"], packed["w_t"], packed["wc_t"],
                packed["wf1_t"], packed["small"])

    vmem = pl.BlockSpec(memory_space=pltpu.MemorySpace.VMEM)
    bytes_accessed = sum(int(a.size) * a.dtype.itemsize for a in operands)
    bytes_accessed += 4 * 4 * E                        # (1, 4E) f32 output
    cost = pl.CostEstimate(flops=4_000_000, transcendentals=25_000,
                           bytes_accessed=int(bytes_accessed))

    out = pl.pallas_call(
        _make_fused_kernel(B, M, N, E, Vpad),
        out_shape=jax.ShapeDtypeStruct((1, 4 * E), jnp.float32),
        in_specs=[vmem] * len(operands),
        out_specs=vmem,
        cost_estimate=cost,
    )(*operands)
    return out[0, :B]


# ------------------------ params / reference / main --------------------------
def init_params(key, E=EMBEDDING_DIM, vocab=VOCAB_LEN):
    ks = jax.random.split(key, 19)

    def u(k, shape, scale=0.1):
        return jax.random.uniform(k, shape, jnp.float32, -scale, scale)

    emb = u(ks[0], (vocab, E), 0.5).at[PAD].set(0.0)   # padding_idx row zeroed
    lstm = dict(
        w_ih_f=u(ks[1], (4 * E, E)), w_hh_f=u(ks[2], (4 * E, E)),
        b_f=u(ks[3], (1, 4 * E)),
        w_ih_r=u(ks[4], (4 * E, E)), w_hh_r=u(ks[5], (4 * E, E)),
        b_r=u(ks[6], (1, 4 * E)),
    )
    return dict(
        emb=emb, lstm=lstm,
        wg=u(ks[7], (2 * E, 2 * E)), bg=u(ks[8], (1, 2 * E)),
        w=u(ks[9], (4 * E, 4 * E)), bw=u(ks[10], (1, 4 * E)),
        c0=u(ks[11], (4 * E, 4 * E)), c1=u(ks[12], (4 * E, 4 * E)),
        c2=u(ks[13], (4 * E, 4 * E)), cb=u(ks[14], (1, 4 * E)),
        wf1=u(ks[15], (E, 4 * E)), bf1=u(ks[16], (1, E)),
        wf2=u(ks[17], (1, E)), bf2=u(ks[18], (1, 1)),
    )


def _ref_forward(p, x1, x2):
    E = EMBEDDING_DIM
    q, a = p["emb"][x1], p["emb"][x2]

    def lstm_dir(x, w_ih, w_hh, b):
        Nb = x.shape[1]

        def step(carry, xt):
            h, c = carry
            gates = xt @ w_ih.T + h @ w_hh.T + b
            i, f, g, o = jnp.split(gates, 4, axis=-1)
            c = jax.nn.sigmoid(f) * c + jax.nn.sigmoid(i) * jnp.tanh(g)
            h = jax.nn.sigmoid(o) * jnp.tanh(c)
            return (h, c), h

        init = (jnp.zeros((Nb, E)), jnp.zeros((Nb, E)))
        return lax.scan(step, init, x)[1]

    def bi(x):
        L = p["lstm"]
        f = lstm_dir(x, L["w_ih_f"], L["w_hh_f"], L["b_f"])
        r = lstm_dir(x[::-1], L["w_ih_r"], L["w_hh_r"], L["b_r"])[::-1]
        return jnp.concatenate([f, r], axis=-1)

    q_bar, a_bar = bi(q), bi(a)
    g = jax.nn.softmax(
        jnp.einsum("bme,bne->bmn", q_bar @ p["wg"].T + p["bg"], a_bar), axis=-1)
    h = jnp.einsum("bme,bmn->bne", q_bar, g)
    cat = jnp.concatenate([(a_bar - h) ** 2, a_bar * h], axis=-1)
    t = jax.nn.relu(cat @ p["w"].T + p["bw"])
    tp = jnp.pad(t, ((0, 0), (1, 1), (0, 0)))
    o = (tp[:, :-2] @ p["c0"].T + tp[:, 1:-1] @ p["c1"].T
         + tp[:, 2:] @ p["c2"].T + p["cb"])
    o = jnp.max(o, axis=1)
    o = jax.nn.relu(o @ p["wf1"].T + p["bf1"]) @ p["wf2"].T + p["bf2"]
    return o[:, 0]


if __name__ == "__main__":
    key = jax.random.PRNGKey(0)
    pkey, k1, k2 = jax.random.split(key, 3)
    params = init_params(pkey)
    packed = pack_params(params)           # one-time weight transpose / packing

    B, M, N = 2, 8, 8
    x1 = jax.random.randint(k1, (B, M), 0, VOCAB_LEN, dtype=jnp.int32)
    x2 = jax.random.randint(k2, (B, N), 0, VOCAB_LEN, dtype=jnp.int32)

    out = jax.jit(compagg_forward)(packed, x1, x2)
    out = jax.block_until_ready(out)

    ref = _ref_forward(params, x1, x2)
    assert out.shape == (B,)
    assert bool(jnp.all(jnp.isfinite(out)))
    assert bool(jnp.allclose(out, ref, rtol=5e-2, atol=5e-2))
    print("KERNEL_OK")
</pallas_src>

<mosaic_0001>
module attributes {stable_mosaic.version = 11 : i64} {
  func.func @kernel(%arg0: memref<32x1xi32, #tpu.memory_space<vmem>>, %arg1: memref<64x32xf32, #tpu.memory_space<vmem>>, %arg2: memref<32x256xf32, #tpu.memory_space<vmem>>, %arg3: memref<32x256xf32, #tpu.memory_space<vmem>>, %arg4: memref<64x64xf32, #tpu.memory_space<vmem>>, %arg5: memref<128x128xf32, #tpu.memory_space<vmem>>, %arg6: memref<128x384xf32, #tpu.memory_space<vmem>>, %arg7: memref<128x32xf32, #tpu.memory_space<vmem>>, %arg8: memref<8x128xf32, #tpu.memory_space<vmem>>, %arg9: memref<1x128xf32, #tpu.memory_space<vmem>>) attributes {dimension_semantics = [], scalar_prefetch = 0 : i64, scratch_operands = 0 : i64, tpu.core_type = #tpu.core_type<tc>} {
    %c0 = arith.constant 0 : index
    %c0_0 = arith.constant 0 : index
    %0 = vector.load %arg8[%c0, %c0_0] : memref<8x128xf32, #tpu.memory_space<vmem>>, vector<8x128xf32>
    %1 = vector.extract_strided_slice %0 {offsets = [0, 0], sizes = [1, 128], strides = [1, 1]} : vector<8x128xf32> to vector<1x128xf32>
    %2 = vector.extract_strided_slice %0 {offsets = [1, 0], sizes = [1, 128], strides = [1, 1]} : vector<8x128xf32> to vector<1x128xf32>
    %3 = vector.extract_strided_slice %0 {offsets = [2, 0], sizes = [1, 64], strides = [1, 1]} : vector<8x128xf32> to vector<1x64xf32>
    %4 = vector.extract_strided_slice %0 {offsets = [3, 0], sizes = [1, 128], strides = [1, 1]} : vector<8x128xf32> to vector<1x128xf32>
    %5 = vector.extract_strided_slice %0 {offsets = [4, 0], sizes = [1, 128], strides = [1, 1]} : vector<8x128xf32> to vector<1x128xf32>
    %6 = vector.extract_strided_slice %0 {offsets = [5, 0], sizes = [1, 32], strides = [1, 1]} : vector<8x128xf32> to vector<1x32xf32>
    %7 = vector.extract_strided_slice %0 {offsets = [6, 0], sizes = [1, 32], strides = [1, 1]} : vector<8x128xf32> to vector<1x32xf32>
    %8 = vector.extract_strided_slice %0 {offsets = [7, 0], sizes = [1, 1], strides = [1, 1]} : vector<8x128xf32> to vector<1x1xf32>
    %c0_1 = arith.constant 0 : index
    %c0_2 = arith.constant 0 : index
    %9 = vector.load %arg0[%c0_1, %c0_2] : memref<32x1xi32, #tpu.memory_space<vmem>>, vector<32x1xi32>
    %10 = tpu.iota {dimensions = array<i32: 1>} : vector<32x64xi32>
    %11 = vector.broadcast %9 : vector<32x1xi32> to vector<32x64xi32>
    %12 = arith.cmpi eq, %11, %10 : vector<32x64xi32>
    %13 = arith.extui %12 : vector<32x64xi1> to vector<32x64xi32>
    %14 = arith.sitofp %13 : vector<32x64xi32> to vector<32x64xf32>
    %c0_3 = arith.constant 0 : index
    %c0_4 = arith.constant 0 : index
    %15 = vector.load %arg1[%c0_3, %c0_4] : memref<64x32xf32, #tpu.memory_space<vmem>>, vector<64x32xf32>
    %cst = arith.constant dense<0.000000e+00> : vector<32x32xf32>
    %16 = tpu.matmul %14, %15, %cst {dimension_numbers = #tpu.dot_dimension_numbers<[1], [0], [0], [1], [0, 0, 1, 1], [], []>} : vector<32x64xf32>, vector<64x32xf32>, vector<32x32xf32> -> vector<32x32xf32>
    %c0_5 = arith.constant 0 : index
    %c0_6 = arith.constant 0 : index
    %17 = vector.load %arg2[%c0_5, %c0_6] : memref<32x256xf32, #tpu.memory_space<vmem>>, vector<32x256xf32>
    %cst_7 = arith.constant dense<0.000000e+00> : vector<32x256xf32>
    %18 = tpu.matmul %16, %17, %cst_7 {dimension_numbers = #tpu.dot_dimension_numbers<[1], [0], [0], [1], [0, 0, 1, 1], [], []>} : vector<32x32xf32>, vector<32x256xf32>, vector<32x256xf32> -> vector<32x256xf32>
    %c0_8 = arith.constant 0 : index
    %c0_9 = arith.constant 0 : index
    %19 = vector.load %arg3[%c0_8, %c0_9] : memref<32x256xf32, #tpu.memory_space<vmem>>, vector<32x256xf32>
    %20 = vector.extract_strided_slice %19 {offsets = [0, 0], sizes = [32, 128], strides = [1, 1]} : vector<32x256xf32> to vector<32x128xf32>
    %21 = vector.extract_strided_slice %19 {offsets = [0, 128], sizes = [32, 128], strides = [1, 1]} : vector<32x256xf32> to vector<32x128xf32>
    %cst_10 = arith.constant 0.000000e+00 : f32
    %22 = vector.broadcast %cst_10 : f32 to vector<16x32xf32>
    %cst_11 = arith.constant 0.000000e+00 : f32
    %23 = vector.broadcast %cst_11 : f32 to vector<16x32xf32>
    %24 = vector.extract_strided_slice %18 {offsets = [0, 0], sizes = [16, 128], strides = [1, 1]} : vector<32x256xf32> to vector<16x128xf32>
    %25 = vector.broadcast %1 : vector<1x128xf32> to vector<16x128xf32>
    %26 = arith.addf %24, %25 : vector<16x128xf32>
    %27 = arith.negf %26 : vector<16x128xf32>
    %28 = math.exp %27 : vector<16x128xf32>
    %cst_12 = arith.constant 1.000000e+00 : f32
    %29 = vector.broadcast %cst_12 : f32 to vector<16x128xf32>
    %30 = arith.addf %29, %28 : vector<16x128xf32>
    %31 = arith.divf %29, %30 : vector<16x128xf32>
    %32 = math.tanh %26 : vector<16x128xf32>
    %33 = vector.extract_strided_slice %31 {offsets = [0, 0], sizes = [16, 32], strides = [1, 1]} : vector<16x128xf32> to vector<16x32xf32>
    %34 = vector.extract_strided_slice %31 {offsets = [0, 32], sizes = [16, 32], strides = [1, 1]} : vector<16x128xf32> to vector<16x32xf32>
    %35 = vector.extract_strided_slice %31 {offsets = [0, 96], sizes = [16, 32], strides = [1, 1]} : vector<16x128xf32> to vector<16x32xf32>
    %36 = vector.extract_strided_slice %32 {offsets = [0, 64], sizes = [16, 32], strides = [1, 1]} : vector<16x128xf32> to vector<16x32xf32>
    %37 = arith.mulf %34, %22 : vector<16x32xf32>
    %38 = arith.mulf %33, %36 : vector<16x32xf32>
    %39 = arith.addf %37, %38 : vector<16x32xf32>
    %40 = math.tanh %39 : vector<16x32xf32>
    %41 = arith.mulf %35, %40 : vector<16x32xf32>
    %42 = vector.extract_strided_slice %18 {offsets = [16, 128], sizes = [16, 128], strides = [1, 1]} : vector<32x256xf32> to vector<16x128xf32>
    %43 = vector.broadcast %2 : vector<1x128xf32> to vector<16x128xf32>
    %44 = arith.addf %42, %43 : vector<16x128xf32>
    %45 = arith.negf %44 : vector<16x128xf32>
    %46 = math.exp %45 : vector<16x128xf32>
    %cst_13 = arith.constant 1.000000e+00 : f32
    %47 = vector.broadcast %cst_13 : f32 to vector<16x128xf32>
    %48 = arith.addf %47, %46 : vector<16x128xf32>
    %49 = arith.divf %47, %48 : vector<16x128xf32>
    %50 = math.tanh %44 : vector<16x128xf32>
    %51 = vector.extract_strided_slice %49 {offsets = [0, 0], sizes = [16, 32], strides = [1, 1]} : vector<16x128xf32> to vector<16x32xf32>
    %52 = vector.extract_strided_slice %49 {offsets = [0, 32], sizes = [16, 32], strides = [1, 1]} : vector<16x128xf32> to vector<16x32xf32>
    %53 = vector.extract_strided_slice %49 {offsets = [0, 96], sizes = [16, 32], strides = [1, 1]} : vector<16x128xf32> to vector<16x32xf32>
    %54 = vector.extract_strided_slice %50 {offsets = [0, 64], sizes = [16, 32], strides = [1, 1]} : vector<16x128xf32> to vector<16x32xf32>
    %55 = arith.mulf %52, %23 : vector<16x32xf32>
    %56 = arith.mulf %51, %54 : vector<16x32xf32>
    %57 = arith.addf %55, %56 : vector<16x32xf32>
    %58 = math.tanh %57 : vector<16x32xf32>
    %59 = arith.mulf %53, %58 : vector<16x32xf32>
    %60 = vector.extract_strided_slice %18 {offsets = [16, 0], sizes = [16, 128], strides = [1, 1]} : vector<32x256xf32> to vector<16x128xf32>
    %61 = vector.broadcast %1 : vector<1x128xf32> to vector<16x128xf32>
    %62 = arith.addf %60, %61 : vector<16x128xf32>
    %cst_14 = arith.constant dense<0.000000e+00> : vector<16x128xf32>
    %63 = tpu.matmul %41, %20, %cst_14 {dimension_numbers = #tpu.dot_dimension_numbers<[1], [0], [0], [1], [0, 0, 1, 1], [], []>} : vector<16x32xf32>, vector<32x128xf32>, vector<16x128xf32> -> vector<16x128xf32>
    %64 = arith.addf %62, %63 : vector<16x128xf32>
    %65 = arith.negf %64 : vector<16x128xf32>
    %66 = math.exp %65 : vector<16x128xf32>
    %cst_15 = arith.constant 1.000000e+00 : f32
    %67 = vector.broadcast %cst_15 : f32 to vector<16x128xf32>
    %68 = arith.addf %67, %66 : vector<16x128xf32>
    %69 = arith.divf %67, %68 : vector<16x128xf32>
    %70 = math.tanh %64 : vector<16x128xf32>
    %71 = vector.extract_strided_slice %69 {offsets = [0, 0], sizes = [16, 32], strides = [1, 1]} : vector<16x128xf32> to vector<16x32xf32>
    %72 = vector.extract_strided_slice %69 {offsets = [0, 32], sizes = [16, 32], strides = [1, 1]} : vector<16x128xf32> to vector<16x32xf32>
    %73 = vector.extract_strided_slice %69 {offsets = [0, 96], sizes = [16, 32], strides = [1, 1]} : vector<16x128xf32> to vector<16x32xf32>
    %74 = vector.extract_strided_slice %70 {offsets = [0, 64], sizes = [16, 32], strides = [1, 1]} : vector<16x128xf32> to vector<16x32xf32>
    %75 = arith.mulf %72, %39 : vector<16x32xf32>
    %76 = arith.mulf %71, %74 : vector<16x32xf32>
    %77 = arith.addf %75, %76 : vector<16x32xf32>
    %78 = math.tanh %77 : vector<16x32xf32>
    %79 = arith.mulf %73, %78 : vector<16x32xf32>
    %80 = vector.extract_strided_slice %18 {offsets = [0, 128], sizes = [16, 128], strides = [1, 1]} : vector<32x256xf32> to vector<16x128xf32>
    %81 = vector.broadcast %2 : vector<1x128xf32> to vector<16x128xf32>
    %82 = arith.addf %80, %81 : vector<16x128xf32>
    %cst_16 = arith.constant dense<0.000000e+00> : vector<16x128xf32>
    %83 = tpu.matmul %59, %21, %cst_16 {dimension_numbers = #tpu.dot_dimension_numbers<[1], [0], [0], [1], [0, 0, 1, 1], [], []>} : vector<16x32xf32>, vector<32x128xf32>, vector<16x128xf32> -> vector<16x128xf32>
    %84 = arith.addf %82, %83 : vector<16x128xf32>
    %85 = arith.negf %84 : vector<16x128xf32>
    %86 = math.exp %85 : vector<16x128xf32>
    %cst_17 = arith.constant 1.000000e+00 : f32
    %87 = vector.broadcast %cst_17 : f32 to vector<16x128xf32>
    %88 = arith.addf %87, %86 : vector<16x128xf32>
    %89 = arith.divf %87, %88 : vector<16x128xf32>
    %90 = math.tanh %84 : vector<16x128xf32>
    %91 = vector.extract_strided_slice %89 {offsets = [0, 0], sizes = [16, 32], strides = [1, 1]} : vector<16x128xf32> to vector<16x32xf32>
    %92 = vector.extract_strided_slice %89 {offsets = [0, 32], sizes = [16, 32], strides = [1, 1]} : vector<16x128xf32> to vector<16x32xf32>
    %93 = vector.extract_strided_slice %89 {offsets = [0, 96], sizes = [16, 32], strides = [1, 1]} : vector<16x128xf32> to vector<16x32xf32>
    %94 = vector.extract_strided_slice %90 {offsets = [0, 64], sizes = [16, 32], strides = [1, 1]} : vector<16x128xf32> to vector<16x32xf32>
    %95 = arith.mulf %92, %57 : vector<16x32xf32>
    %96 = arith.mulf %91, %94 : vector<16x32xf32>
    %97 = arith.addf %95, %96 : vector<16x32xf32>
    %98 = math.tanh %97 : vector<16x32xf32>
    %99 = arith.mulf %93, %98 : vector<16x32xf32>
    %100 = tpu.concatenate %41, %79 in 0 : vector<16x32xf32>, vector<16x32xf32> -> vector<32x32xf32>
    %101 = tpu.concatenate %99, %59 in 0 : vector<16x32xf32>, vector<16x32xf32> -> vector<32x32xf32>
    %102 = tpu.concatenate %100, %101 in 1 : vector<32x32xf32>, vector<32x32xf32> -> vector<32x64xf32>
    %103 = vector.shape_cast %102 : vector<32x64xf32> to vector<2x16x64xf32>
    %104 = vector.extract_strided_slice %103 {offsets = [0, 0, 0], sizes = [2, 8, 64], strides = [1, 1, 1]} : vector<2x16x64xf32> to vector<2x8x64xf32>
    %105 = vector.extract_strided_slice %103 {offsets = [0, 8, 0], sizes = [2, 8, 64], strides = [1, 1, 1]} : vector<2x16x64xf32> to vector<2x8x64xf32>
    %c0_18 = arith.constant 0 : index
    %c0_19 = arith.constant 0 : index
    %106 = vector.load %arg4[%c0_18, %c0_19] : memref<64x64xf32, #tpu.memory_space<vmem>>, vector<64x64xf32>
    %cst_20 = arith.constant dense<0.000000e+00> : vector<32x64xf32>
    %107 = tpu.matmul %102, %106, %cst_20 {dimension_numbers = #tpu.dot_dimension_numbers<[1], [0], [0], [1], [0, 0, 1, 1], [], []>} : vector<32x64xf32>, vector<64x64xf32>, vector<32x64xf32> -> vector<32x64xf32>
    %108 = vector.broadcast %3 : vector<1x64xf32> to vector<32x64xf32>
    %109 = arith.addf %107, %108 : vector<32x64xf32>
    %110 = vector.shape_cast %109 : vector<32x64xf32> to vector<2x16x64xf32>
    %111 = vector.extract_strided_slice %110 {offsets = [0, 0, 0], sizes = [2, 8, 64], strides = [1, 1, 1]} : vector<2x16x64xf32> to vector<2x8x64xf32>
    "tpu.trace_start"() <{level = 10 : i32, message = "bne,bme->bnm"}> : () -> ()
    %cst_21 = arith.constant dense<0.000000e+00> : vector<2x8x8xf32>
    %112 = tpu.matmul %105, %111, %cst_21 {dimension_numbers = #tpu.dot_dimension_numbers<[2], [2], [1], [1], [0, 0, 0, 1, 1, 1], [0], [0]>} : vector<2x8x64xf32>, vector<2x8x64xf32>, vector<2x8x8xf32> -> vector<2x8x8xf32>
    "tpu.trace_stop"() : () -> ()
    %cst_22 = arith.constant dense<0xFF800000> : vector<2x8xf32>
    %113 = vector.multi_reduction <maximumf>, %112, %cst_22 [1] : vector<2x8x8xf32> to vector<2x8xf32>
    %114 = vector.shape_cast %113 : vector<2x8xf32> to vector<2x1x8xf32>
    %115 = vector.broadcast %114 : vector<2x1x8xf32> to vector<2x8x8xf32>
    %116 = arith.subf %112, %115 : vector<2x8x8xf32>
    %117 = math.exp %116 : vector<2x8x8xf32>
    %cst_23 = arith.constant dense<0.000000e+00> : vector<2x8xf32>
    %118 = vector.multi_reduction <add>, %117, %cst_23 [1] : vector<2x8x8xf32> to vector<2x8xf32>
    %119 = vector.shape_cast %118 : vector<2x8xf32> to vector<2x1x8xf32>
    %120 = vector.broadcast %119 : vector<2x1x8xf32> to vector<2x8x8xf32>
    %121 = arith.divf %117, %120 : vector<2x8x8xf32>
    "tpu.trace_start"() <{level = 10 : i32, message = "bnm,bme->bne"}> : () -> ()
    %cst_24 = arith.constant dense<0.000000e+00> : vector<2x8x64xf32>
    %122 = tpu.matmul %121, %104, %cst_24 {dimension_numbers = #tpu.dot_dimension_numbers<[2], [1], [1], [2], [0, 0, 0, 1, 1, 2], [0], [0]>} : vector<2x8x8xf32>, vector<2x8x64xf32>, vector<2x8x64xf32> -> vector<2x8x64xf32>
    "tpu.trace_stop"() : () -> ()
    %123 = arith.subf %105, %122 : vector<2x8x64xf32>
    %124 = arith.mulf %123, %123 : vector<2x8x64xf32>
    %125 = vector.shape_cast %124 : vector<2x8x64xf32> to vector<16x64xf32>
    %126 = arith.mulf %105, %122 : vector<2x8x64xf32>
    %127 = vector.shape_cast %126 : vector<2x8x64xf32> to vector<16x64xf32>
    %c0_25 = arith.constant 0 : index
    %c0_26 = arith.constant 0 : index
    %128 = vector.load %arg5[%c0_25, %c0_26] : memref<128x128xf32, #tpu.memory_space<vmem>>, vector<64x128xf32>
    %c64 = arith.constant 64 : index
    %c0_27 = arith.constant 0 : index
    %129 = vector.load %arg5[%c64, %c0_27] : memref<128x128xf32, #tpu.memory_space<vmem>>, vector<64x128xf32>
    %cst_28 = arith.constant dense<0.000000e+00> : vector<16x128xf32>
    %130 = tpu.matmul %125, %128, %cst_28 {dimension_numbers = #tpu.dot_dimension_numbers<[1], [0], [0], [1], [0, 0, 1, 1], [], []>} : vector<16x64xf32>, vector<64x128xf32>, vector<16x128xf32> -> vector<16x128xf32>
    %cst_29 = arith.constant dense<0.000000e+00> : vector<16x128xf32>
    %131 = tpu.matmul %127, %129, %cst_29 {dimension_numbers = #tpu.dot_dimension_numbers<[1], [0], [0], [1], [0, 0, 1, 1], [], []>} : vector<16x64xf32>, vector<64x128xf32>, vector<16x128xf32> -> vector<16x128xf32>
    %132 = arith.addf %130, %131 : vector<16x128xf32>
    %133 = vector.broadcast %4 : vector<1x128xf32> to vector<16x128xf32>
    %134 = arith.addf %132, %133 : vector<16x128xf32>
    %cst_30 = arith.constant 0.000000e+00 : f32
    %135 = vector.broadcast %cst_30 : f32 to vector<16x128xf32>
    %136 = arith.maximumf %134, %135 : vector<16x128xf32>
    %c0_31 = arith.constant 0 : index
    %c0_32 = arith.constant 0 : index
    %137 = vector.load %arg6[%c0_31, %c0_32] : memref<128x384xf32, #tpu.memory_space<vmem>>, vector<128x384xf32>
    %cst_33 = arith.constant dense<0.000000e+00> : vector<16x384xf32>
    %138 = tpu.matmul %136, %137, %cst_33 {dimension_numbers = #tpu.dot_dimension_numbers<[1], [0], [0], [1], [0, 0, 1, 1], [], []>} : vector<16x128xf32>, vector<128x384xf32>, vector<16x384xf32> -> vector<16x384xf32>
    %139 = vector.extract_strided_slice %138 {offsets = [0, 0], sizes = [16, 128], strides = [1, 1]} : vector<16x384xf32> to vector<16x128xf32>
    %140 = vector.extract_strided_slice %138 {offsets = [0, 128], sizes = [16, 128], strides = [1, 1]} : vector<16x384xf32> to vector<16x128xf32>
    %141 = vector.extract_strided_slice %138 {offsets = [0, 256], sizes = [16, 128], strides = [1, 1]} : vector<16x384xf32> to vector<16x128xf32>
    %cst_34 = arith.constant 0.000000e+00 : f32
    %142 = vector.broadcast %cst_34 : f32 to vector<1x128xf32>
    %143 = tpu.iota {dimensions = array<i32: 0>} : vector<16x1xi32>
    %c8_i32 = arith.constant 8 : i32
    %c0_i32 = arith.constant 0 : i32
    %144 = arith.cmpi eq, %c8_i32, %c0_i32 : i32
    %c1_i32 = arith.constant 1 : i32
    %145 = arith.select %144, %c1_i32, %c8_i32 : i32
    %146 = vector.broadcast %145 : i32 to vector<16x1xi32>
    %147 = arith.remsi %143, %146 : vector<16x1xi32>
    %c0_i32_35 = arith.constant 0 : i32
    %148 = vector.broadcast %c0_i32_35 : i32 to vector<16x1xi32>
    %149 = arith.cmpi ne, %147, %148 : vector<16x1xi32>
    %c0_i32_36 = arith.constant 0 : i32
    %150 = vector.broadcast %c0_i32_36 : i32 to vector<16x1xi32>
    %151 = arith.cmpi slt, %147, %150 : vector<16x1xi32>
    %c0_i32_37 = arith.constant 0 : i32
    %152 = arith.cmpi slt, %145, %c0_i32_37 : i32
    %153 = vector.broadcast %152 : i1 to vector<16x1xi1>
    %154 = vector.broadcast %153 : vector<16x1xi1> to vector<16x1xi1>
    %155 = arith.xori %151, %154 : vector<16x1xi1>
    %156 = arith.andi %155, %149 : vector<16x1xi1>
    %157 = vector.broadcast %145 : i32 to vector<16x1xi32>
    %158 = arith.addi %147, %157 : vector<16x1xi32>
    %159 = arith.select %156, %158, %147 : vector<16x1xi1>, vector<16x1xi32>
    %c0_i32_38 = arith.constant 0 : i32
    %160 = vector.broadcast %c0_i32_38 : i32 to vector<16x1xi32>
    %161 = arith.cmpi eq, %159, %160 : vector<16x1xi32>
    %162 = vector.extract_strided_slice %139 {offsets = [0, 0], sizes = [15, 128], strides = [1, 1]} : vector<16x128xf32> to vector<15x128xf32>
    %163 = tpu.concatenate %142, %162 in 0 : vector<1x128xf32>, vector<15x128xf32> -> vector<16x128xf32>
    %cst_39 = arith.constant 0.000000e+00 : f32
    %164 = vector.shape_cast %161 : vector<16x1xi1> to vector<16x1xi1>
    %165 = vector.broadcast %164 : vector<16x1xi1> to vector<16x128xi1>
    %166 = vector.broadcast %cst_39 : f32 to vector<16x128xf32>
    %167 = arith.select %165, %166, %163 : vector<16x128xi1>, vector<16x128xf32>
    %c8_i32_40 = arith.constant 8 : i32
    %c0_i32_41 = arith.constant 0 : i32
    %168 = arith.cmpi eq, %c8_i32_40, %c0_i32_41 : i32
    %c1_i32_42 = arith.constant 1 : i32
    %169 = arith.select %168, %c1_i32_42, %c8_i32_40 : i32
    %170 = vector.broadcast %169 : i32 to vector<16x1xi32>
    %171 = arith.remsi %143, %170 : vector<16x1xi32>
    %c0_i32_43 = arith.constant 0 : i32
    %172 = vector.broadcast %c0_i32_43 : i32 to vector<16x1xi32>
    %173 = arith.cmpi ne, %171, %172 : vector<16x1xi32>
    %c0_i32_44 = arith.constant 0 : i32
    %174 = vector.broadcast %c0_i32_44 : i32 to vector<16x1xi32>
    %175 = arith.cmpi slt, %171, %174 : vector<16x1xi32>
    %c0_i32_45 = arith.constant 0 : i32
    %176 = arith.cmpi slt, %169, %c0_i32_45 : i32
    %177 = vector.broadcast %176 : i1 to vector<16x1xi1>
    %178 = vector.broadcast %177 : vector<16x1xi1> to vector<16x1xi1>
    %179 = arith.xori %175, %178 : vector<16x1xi1>
    %180 = arith.andi %179, %173 : vector<16x1xi1>
    %181 = vector.broadcast %169 : i32 to vector<16x1xi32>
    %182 = arith.addi %171, %181 : vector<16x1xi32>
    %183 = arith.select %180, %182, %171 : vector<16x1xi1>, vector<16x1xi32>
    %c7_i32 = arith.constant 7 : i32
    %184 = vector.broadcast %c7_i32 : i32 to vector<16x1xi32>
    %185 = arith.cmpi eq, %183, %184 : vector<16x1xi32>
    %186 = vector.extract_strided_slice %141 {offsets = [1, 0], sizes = [15, 128], strides = [1, 1]} : vector<16x128xf32> to vector<15x128xf32>
    %187 = tpu.concatenate %186, %142 in 0 : vector<15x128xf32>, vector<1x128xf32> -> vector<16x128xf32>
    %cst_46 = arith.constant 0.000000e+00 : f32
    %188 = vector.shape_cast %185 : vector<16x1xi1> to vector<16x1xi1>
    %189 = vector.broadcast %188 : vector<16x1xi1> to vector<16x128xi1>
    %190 = vector.broadcast %cst_46 : f32 to vector<16x128xf32>
    %191 = arith.select %189, %190, %187 : vector<16x128xi1>, vector<16x128xf32>
    %192 = vector.broadcast %5 : vector<1x128xf32> to vector<16x128xf32>
    %193 = arith.addf %192, %140 : vector<16x128xf32>
    %194 = arith.addf %193, %167 : vector<16x128xf32>
    %195 = arith.addf %194, %191 : vector<16x128xf32>
    %196 = vector.shape_cast %195 : vector<16x128xf32> to vector<2x8x128xf32>
    %cst_47 = arith.constant dense<0xFF800000> : vector<2x128xf32>
    %197 = vector.multi_reduction <maximumf>, %196, %cst_47 [1] : vector<2x8x128xf32> to vector<2x128xf32>
    %c0_48 = arith.constant 0 : index
    %c0_49 = arith.constant 0 : index
    %198 = vector.load %arg7[%c0_48, %c0_49] : memref<128x32xf32, #tpu.memory_space<vmem>>, vector<128x32xf32>
    %cst_50 = arith.constant dense<0.000000e+00> : vector<2x32xf32>
    %199 = tpu.matmul %197, %198, %cst_50 {dimension_numbers = #tpu.dot_dimension_numbers<[1], [0], [0], [1], [0, 0, 1, 1], [], []>} : vector<2x128xf32>, vector<128x32xf32>, vector<2x32xf32> -> vector<2x32xf32>
    %200 = vector.broadcast %6 : vector<1x32xf32> to vector<2x32xf32>
    %201 = arith.addf %199, %200 : vector<2x32xf32>
    %cst_51 = arith.constant 0.000000e+00 : f32
    %202 = vector.broadcast %cst_51 : f32 to vector<2x32xf32>
    %203 = arith.maximumf %201, %202 : vector<2x32xf32>
    %cst_52 = arith.constant dense<0.000000e+00> : vector<1x2xf32>
    %204 = tpu.matmul %7, %203, %cst_52 {dimension_numbers = #tpu.dot_dimension_numbers<[1], [1], [0], [0], [0, 0, 1, 0], [], []>} : vector<1x32xf32>, vector<2x32xf32>, vector<1x2xf32> -> vector<1x2xf32>
    %205 = vector.broadcast %8 : vector<1x1xf32> to vector<1x2xf32>
    %206 = arith.addf %204, %205 : vector<1x2xf32>
    %cst_53 = arith.constant 0.000000e+00 : f32
    %207 = vector.broadcast %cst_53 : f32 to vector<1x126xf32>
    %208 = tpu.concatenate %206, %207 in 1 : vector<1x2xf32>, vector<1x126xf32> -> vector<1x128xf32>
    %c0_54 = arith.constant 0 : index
    %c0_55 = arith.constant 0 : index
    %209 = vector.load %arg9[%c0_54, %c0_55] : memref<1x128xf32, #tpu.memory_space<vmem>>, vector<1x128xf32>
    tpu.vector_store %arg9[%c0_54, %c0_55], %208 {strides = array<i32>} : memref<1x128xf32, #tpu.memory_space<vmem>>, vector<1x128xf32>,
    return
  }
}

</mosaic_0001>

<llo_original>
// kernel: compagg_forward.1
$region0: #{compagg_forward.1}
  #allocation0 [shape = 'u32[]', space=smem, size = 0x4, offset = 0x4, fixed_abs, tag = 'smem constant byte address 0x4 - core index']
  #allocation1 [shape = 'u32[144,128]{1,0:T(1,128)}', space=vmem, size = 0x12000, scoped, tag = 'internal scratch']
  %s0 = inlined_call_operand.vmem [shape: s32[32,1], index: 0, kind: input, shape index: {}]
  %s1 = inlined_call_operand.vmem [shape: f32[64,32], index: 1, kind: input, shape index: {}]
  %s2 = inlined_call_operand.vmem [shape: f32[32,256], index: 2, kind: input, shape index: {}]
  %s3 = inlined_call_operand.vmem [shape: f32[32,256], index: 3, kind: input, shape index: {}]
  %s4 = inlined_call_operand.hbm [shape: f32[64,64], index: 4, kind: input, shape index: {}]
  %s5 = inlined_call_operand.vmem [shape: f32[128,128], index: 5, kind: input, shape index: {}]
  %s6 = inlined_call_operand.hbm [shape: f32[128,384], index: 6, kind: input, shape index: {}]
  %s7 = inlined_call_operand.vmem [shape: f32[128,32], index: 7, kind: input, shape index: {}]
  %s8 = inlined_call_operand.vmem [shape: f32[8,128], index: 8, kind: input, shape index: {}]
  %s9 = inlined_call_operand.vmem [shape: f32[1,128], index: 9, kind: output, shape index: {}]
  %s10 = sld [smem:[#allocation0]]
  $region54: #{compagg_forward.1} parent=0
    _
  %s12 = ssub.s32 1, %s10
  %s13 = scalar_select 0, %s12, %s10
  $region1: #{compagg_forward.1} parent=0
    #allocation2 [shape = 'u8[32768]{0}', space=vmem, size = 0x8000, scoped, tag = 'input window, operand 4, single buffered']
    #allocation3 [shape = 's32[1]{0}', space=sflag, size = 0x4, scoped, tag = 'scoped memory for compagg_forward.1']
    #allocation4 [shape = 'u8[196608]{0}', space=vmem, size = 0x30000, scoped, tag = 'input window, operand 6, single buffered']
    #allocation5 [shape = 's32[1]{0}', space=sflag, size = 0x4, scoped, tag = 'scoped memory for compagg_forward.1']
    %14 = vsyncpa [#allocation3], 0
    %15 = vsyncpa [#allocation5], 0
    // Predicated region
    $region2: #{compagg_forward.1} parent=1 // pred_check
      _
    $region3: #{compagg_forward.1} parent=1 // pred_check_branch
      %17 = sbr.rel (0) target = $region5
    $region4: #{compagg_forward.1} parent=1 // pred_region
      _
    $region5: #{compagg_forward.1} parent=1 // pred_fallthru
      _
    // Predicated region
    $region6: #{compagg_forward.1} parent=1 // pred_check
      _
    $region7: #{compagg_forward.1} parent=1 // pred_check_branch
      %19 = sbr.rel (0) target = $region9
    $region8: #{compagg_forward.1} parent=1 // pred_region
      _
    $region9: #{compagg_forward.1} parent=1 // pred_fallthru
      _
    // Predicated region
    $region10: #{compagg_forward.1} parent=1 // pred_check
      _
    $region11: #{compagg_forward.1} parent=1 // pred_check_branch
      %21 = sbr.rel (0) target = $region13
    $region12: #{compagg_forward.1} parent=1 // pred_region
      _
    $region13: #{compagg_forward.1} parent=1 // pred_fallthru
      _
    // Predicated region
    $region14: #{compagg_forward.1} parent=1 // pred_check
      _
    $region15: #{compagg_forward.1} parent=1 // pred_check_branch
      %23 = sbr.rel (0) target = $region17
    $region16: #{compagg_forward.1} parent=1 // pred_region
      _
    $region17: #{compagg_forward.1} parent=1 // pred_fallthru
      _
    // Predicated region
    $region18: #{compagg_forward.1} parent=1 // pred_check
      _
    $region19: #{compagg_forward.1} parent=1 // pred_check_branch
      %25 = sbr.rel (0) target = $region21
    $region20: #{compagg_forward.1} parent=1 // pred_region
      %s27 = ssub.s32 1024, 1024
      %28 = vsyncadd [#allocation3], %s27
      %s29 = sshll.u32 [#allocation2], 4
      %s30 = int_to_ptr.vmem [resolvable:$true] %s29
      %35 = dma.hbm_to_vmem [thread:$0]  %s4, 1024, %s30, [#allocation3], 128, 128, 8
    $region21: #{compagg_forward.1} parent=1 // pred_fallthru
      _
    // Predicated region
    $region22: #{compagg_forward.1} parent=1 // pred_check
      _
    $region23: #{compagg_forward.1} parent=1 // pred_check_branch
      %37 = sbr.rel (0) target = $region25
    $region24: #{compagg_forward.1} parent=1 // pred_region
      _
    $region25: #{compagg_forward.1} parent=1 // pred_fallthru
      _
    // Predicated region
    $region26: #{compagg_forward.1} parent=1 // pred_check
      _
    $region27: #{compagg_forward.1} parent=1 // pred_check_branch
      %39 = sbr.rel (0) target = $region29
    $region28: #{compagg_forward.1} parent=1 // pred_region
      %s41 = ssub.s32 6144, 6144
      %42 = vsyncadd [#allocation5], %s41
      %s43 = sshll.u32 [#allocation4], 4
      %s44 = int_to_ptr.vmem [resolvable:$true] %s43
      %49 = dma.hbm_to_vmem [thread:$0]  %s6, 6144, %s44, [#allocation5], 384, 384, 24
    $region29: #{compagg_forward.1} parent=1 // pred_fallthru
      _
    // Predicated region
    $region30: #{compagg_forward.1} parent=1 // pred_check
      _
    $region31: #{compagg_forward.1} parent=1 // pred_check_branch
      %51 = sbr.rel (0) target = $region33
    $region32: #{compagg_forward.1} parent=1 // pred_region
      _
    $region33: #{compagg_forward.1} parent=1 // pred_fallthru
      _
    // Predicated region
    $region34: #{compagg_forward.1} parent=1 // pred_check
      _
    $region35: #{compagg_forward.1} parent=1 // pred_check_branch
      %53 = sbr.rel (0) target = $region37
    $region36: #{compagg_forward.1} parent=1 // pred_region
      _
    $region37: #{compagg_forward.1} parent=1 // pred_fallthru
      _
    // Predicated region
    $region38: #{compagg_forward.1} parent=1 // pred_check
      _
    $region39: #{compagg_forward.1} parent=1 // pred_check_branch
      %55 = sbr.rel (0) target = $region41
    $region40: #{compagg_forward.1} parent=1 // pred_region
      %56 = dma.done [#allocation3], 1024
    $region41: #{compagg_forward.1} parent=1 // pred_fallthru
      _
    // Predicated region
    $region42: #{compagg_forward.1} parent=1 // pred_check
      _
    $region43: #{compagg_forward.1} parent=1 // pred_check_branch
      %58 = sbr.rel (0) target = $region45
    $region44: #{compagg_forward.1} parent=1 // pred_region
      %59 = dma.done [#allocation5], 6144
    $region45: #{compagg_forward.1} parent=1 // pred_fallthru
      _
    %v60 = vld [vmem:[%s8] sm:$0xff]
    %v61 = vld [vmem:[%s0] sm:$0xff]
    %v62 = vld [vmem:[%s0 + $0x8] sm:$0xff]
    %v63 = vld [vmem:[%s0 + $0x10] sm:$0xff]
    %v64 = vld [vmem:[%s0 + $0x18] sm:$0xff]
    %v65 = vlaneseq
    %v66 = vand.u32 %v65, 127
    %67 = vset.pattern.permute.xlu0 0
    %68 = vperm.xlu0 %67, %v61
    %v69 = vpop.permute.xlu0 %68
    %70 = vset.pattern.permute.xlu0 0
    %71 = vperm.xlu0 %70, %v62
    %v72 = vpop.permute.xlu0 %71
    %73 = vset.pattern.permute.xlu0 0
    %74 = vperm.xlu0 %73, %v63
    %v75 = vpop.permute.xlu0 %74
    %76 = vset.pattern.permute.xlu0 0
    %77 = vperm.xlu0 %76, %v64
    %v78 = vpop.permute.xlu0 %77
    %vm79 = vcmp.eq.s32.totalorder %v69, %v66
    %vm80 = vcmp.eq.s32.totalorder %v72, %v66
    %vm81 = vcmp.eq.s32.totalorder %v75, %v66
    %vm82 = vcmp.eq.s32.totalorder %v78, %v66
    %v83 = vsel %vm79, 1, 0
    %v84 = vsel %vm80, 1, 0
    %v85 = vsel %vm81, 1, 0
    %v86 = vsel %vm82, 1, 0
    %v87 = vcvt.s32.f32 %v83
    %v88 = vcvt.s32.f32 %v84
    %v89 = vcvt.s32.f32 %v85
    %v90 = vcvt.s32.f32 %v86
    %v91 = vld [vmem:[%s1] sm:$0xff]
    %v92 = vld [vmem:[%s1 + $0x8] sm:$0xff]
    %v93 = vld [vmem:[%s1 + $0x10] sm:$0xff]
    %v94 = vld [vmem:[%s1 + $0x18] sm:$0xff]
    %v95 = vld [vmem:[%s1 + $0x20] sm:$0xff]
    %v96 = vld [vmem:[%s1 + $0x28] sm:$0xff]
    %v97 = vld [vmem:[%s1 + $0x30] sm:$0xff]
    %v98 = vld [vmem:[%s1 + $0x38] sm:$0xff]
    %vm99 = vcmask 523264
    %v101 = vsel %vm99, %v87, 0
    %v104 = vsel %vm99, %v88, 0
    %v107 = vsel %vm99, %v89, 0
    %v110 = vsel %vm99, %v90, 0
    %112 = vmatprep.subr.mxu0 0.0
    %113 = vmatpush1.msra.mxu0 0.0
    %114 = vmatprep.subr.mxu0 0.0
    %115 = vmatpush1.msra.mxu0 0.0
    %116 = vmatprep.subr.mxu0 0.0
    %117 = vmatpush1.msra.mxu0 0.0
    %118 = vmatprep.subr.mxu0 0.0
    %119 = vmatpush1.msra.mxu0 0.0
    %120 = vmatprep.subr.mxu0 0.0
    %121 = vmatpush1.msra.mxu0 0.0
    %122 = vmatprep.subr.mxu0 0.0
    %123 = vmatpush1.msra.mxu0 0.0
    %124 = vmatprep.subr.mxu0 0.0
    %125 = vmatpush1.msra.mxu0 0.0
    %126 = vmatprep.subr.mxu0 0.0
    %127 = vmatpush1.msra.mxu0 0.0
    %128 = vmatprep.subr.mxu0 0.0
    %129 = vmatpush1.msra.mxu0 %v98
    %130 = vmatprep.subr.mxu0 0.0
    %131 = vmatpush1.msra.mxu0 %v97
    %132 = vmatprep.subr.mxu0 0.0
    %133 = vmatpush1.msra.mxu0 %v96
    %134 = vmatprep.subr.mxu0 0.0
    %135 = vmatpush1.msra.mxu0 %v95
    %136 = vmatprep.subr.mxu0 0.0
    %137 = vmatpush1.msra.mxu0 %v94
    %138 = vmatprep.subr.mxu0 0.0
    %139 = vmatpush1.msra.mxu0 %v93
    %140 = vmatprep.subr.mxu0 0.0
    %141 = vmatpush1.msra.mxu0 %v92
    %142 = vmatprep.subr.mxu0 0.0
    %143 = vmatpush1.msra.mxu0 %v91
    %144 = vmatprep.subr.mxu0 0.0
    %145 = vmatpush2.msra.mxu0 0.0
    %146 = vmatprep.subr.mxu0 0.0
    %147 = vmatpush2.msra.mxu0 0.0
    %148 = vmatprep.subr.mxu0 0.0
    %149 = vmatpush2.msra.mxu0 0.0
    %150 = vmatprep.subr.mxu0 0.0
    %151 = vmatpush2.msra.mxu0 0.0
    %152 = vmatprep.subr.mxu0 0.0
    %153 = vmatpush2.msra.mxu0 0.0
    %154 = vmatprep.subr.mxu0 0.0
    %155 = vmatpush2.msra.mxu0 0.0
    %156 = vmatprep.subr.mxu0 0.0
    %157 = vmatpush2.msra.mxu0 0.0
    %158 = vmatprep.subr.mxu0 0.0
    %159 = vmatpush2.msra.mxu0 0.0
    %160 = vmatprep.subr.mxu0 0.0
    %161 = vmatpush2.msra.mxu0 0.0
    %162 = vmatprep.subr.mxu0 0.0
    %163 = vmatpush2.msra.mxu0 0.0
    %164 = vmatprep.subr.mxu0 0.0
    %165 = vmatpush2.msra.mxu0 0.0
    %166 = vmatprep.subr.mxu0 0.0
    %167 = vmatpush2.msra.mxu0 0.0
    %168 = vmatprep.subr.mxu0 0.0
    %169 = vmatpush2.msra.mxu0 0.0
    %170 = vmatprep.subr.mxu0 0.0
    %171 = vmatpush2.msra.mxu0 0.0
    %172 = vmatprep.subr.mxu0 0.0
    %173 = vmatpush2.msra.mxu0 0.0
    %174 = vmatprep.subr.mxu0 0.0
    %175 = vmatpush2.msra.mxu0 0.0
    %176 = vmatprep.mubr.f32.mxu0 0.0
    %177 = vmatmul.mubr.f32.gmra.mxu0 %v101
    %v178 = vpop.f32.mrf.mxu0
    %v179 = vadd.f32 0.0, %v178
    %v180 = vpop.f32.mrf.mxu0
    %181 = vmatprep.mubr.f32.mxu0 0.0
    %182 = vmatmul.mubr.f32.gmra.mxu0 %v104
    %v183 = vpop.f32.mrf.mxu0
    %v184 = vadd.f32 0.0, %v183
    %v185 = vpop.f32.mrf.mxu0
    %186 = vmatprep.mubr.f32.mxu0 0.0
    %187 = vmatmul.mubr.f32.gmra.mxu0 %v107
    %v188 = vpop.f32.mrf.mxu0
    %v189 = vadd.f32 0.0, %v188
    %v190 = vpop.f32.mrf.mxu0
    %191 = vmatprep.mubr.f32.mxu0 0.0
    %192 = vmatmul.mubr.f32.gmra.mxu0 %v110
    %v193 = vpop.f32.mrf.mxu0
    %v194 = vadd.f32 0.0, %v193
    %v195 = vpop.f32.mrf.mxu0
    %196 = vdwg.mxu0
    %v197 = vld [vmem:[%s2] sm:$0xff]
    %v198 = vld [vmem:[%s2 + $0x8] sm:$0xff]
    %v199 = vld [vmem:[%s2 + $0x10] sm:$0xff]
    %v200 = vld [vmem:[%s2 + $0x18] sm:$0xff]
    %v201 = vld [vmem:[%s2 + $0x20] sm:$0xff]
    %v202 = vld [vmem:[%s2 + $0x28] sm:$0xff]
    %v203 = vld [vmem:[%s2 + $0x30] sm:$0xff]
    %v204 = vld [vmem:[%s2 + $0x38] sm:$0xff]
    %vm205 = vcmask 261120
    %v207 = vsel %vm205, %v179, 0
    %v210 = vsel %vm205, %v184, 0
    %v213 = vsel %vm205, %v189, 0
    %v216 = vsel %vm205, %v194, 0
    %218 = vmatprep.subr.mxu0 0.0
    %219 = vmatpush1.msra.mxu0 0.0
    %220 = vmatprep.subr.mxu0 0.0
    %221 = vmatpush1.msra.mxu0 0.0
    %222 = vmatprep.subr.mxu0 0.0
    %223 = vmatpush1.msra.mxu0 0.0
    %224 = vmatprep.subr.mxu0 0.0
    %225 = vmatpush1.msra.mxu0 0.0
    %226 = vmatprep.subr.mxu0 0.0
    %227 = vmatpush1.msra.mxu0 0.0
    %228 = vmatprep.subr.mxu0 0.0
    %229 = vmatpush1.msra.mxu0 0.0
    %230 = vmatprep.subr.mxu0 0.0
    %231 = vmatpush1.msra.mxu0 0.0
    %232 = vmatprep.subr.mxu0 0.0
    %233 = vmatpush1.msra.mxu0 0.0
    %234 = vmatprep.subr.mxu0 0.0
    %235 = vmatpush1.msra.mxu0 0.0
    %236 = vmatprep.subr.mxu0 0.0
    %237 = vmatpush1.msra.mxu0 0.0
    %238 = vmatprep.subr.mxu0 0.0
    %239 = vmatpush1.msra.mxu0 0.0
    %240 = vmatprep.subr.mxu0 0.0
    %241 = vmatpush1.msra.mxu0 0.0
    %242 = vmatprep.subr.mxu0 %v204
    %243 = vmatpush1.msra.mxu0 %v203
    %244 = vmatprep.subr.mxu0 %v202
    %245 = vmatpush1.msra.mxu0 %v201
    %246 = vmatprep.subr.mxu0 %v200
    %247 = vmatpush1.msra.mxu0 %v199
    %248 = vmatprep.subr.mxu0 %v198
    %249 = vmatpush1.msra.mxu0 %v197
    %250 = vmatprep.subr.mxu0 0.0
    %251 = vmatpush2.msra.mxu0 0.0
    %252 = vmatprep.subr.mxu0 0.0
    %253 = vmatpush2.msra.mxu0 0.0
    %254 = vmatprep.subr.mxu0 0.0
    %255 = vmatpush2.msra.mxu0 0.0
    %256 = vmatprep.subr.mxu0 0.0
    %257 = vmatpush2.msra.mxu0 0.0
    %258 = vmatprep.subr.mxu0 0.0
    %259 = vmatpush2.msra.mxu0 0.0
    %260 = vmatprep.subr.mxu0 0.0
    %261 = vmatpush2.msra.mxu0 0.0
    %262 = vmatprep.subr.mxu0 0.0
    %263 = vmatpush2.msra.mxu0 0.0
    %264 = vmatprep.subr.mxu0 0.0
    %265 = vmatpush2.msra.mxu0 0.0
    %266 = vmatprep.subr.mxu0 0.0
    %267 = vmatpush2.msra.mxu0 0.0
    %268 = vmatprep.subr.mxu0 0.0
    %269 = vmatpush2.msra.mxu0 0.0
    %270 = vmatprep.subr.mxu0 0.0
    %271 = vmatpush2.msra.mxu0 0.0
    %272 = vmatprep.subr.mxu0 0.0
    %273 = vmatpush2.msra.mxu0 0.0
    %274 = vmatprep.subr.mxu0 0.0
    %275 = vmatpush2.msra.mxu0 0.0
    %276 = vmatprep.subr.mxu0 0.0
    %277 = vmatpush2.msra.mxu0 0.0
    %278 = vmatprep.subr.mxu0 0.0
    %279 = vmatpush2.msra.mxu0 0.0
    %280 = vmatprep.subr.mxu0 0.0
    %281 = vmatpush2.msra.mxu0 0.0
    %282 = vmatprep.mubr.f32.mxu0 0.0
    %283 = vmatmul.mubr.f32.gmra.mxu0 %v207
    %v284 = vpop.f32.mrf.mxu0
    %v285 = vadd.f32 0.0, %v284
    %v286 = vpop.f32.mrf.mxu0
    %v287 = vadd.f32 0.0, %v286
    %288 = vmatprep.mubr.f32.mxu0 0.0
    %289 = vmatmul.mubr.f32.gmra.mxu0 %v210
    %v290 = vpop.f32.mrf.mxu0
    %v291 = vadd.f32 0.0, %v290
    %v292 = vpop.f32.mrf.mxu0
    %v293 = vadd.f32 0.0, %v292
    %294 = vmatprep.mubr.f32.mxu0 0.0
    %295 = vmatmul.mubr.f32.gmra.mxu0 %v213
    %v296 = vpop.f32.mrf.mxu0
    %v297 = vadd.f32 0.0, %v296
    %v298 = vpop.f32.mrf.mxu0
    %v299 = vadd.f32 0.0, %v298
    %300 = vmatprep.mubr.f32.mxu0 0.0
    %301 = vmatmul.mubr.f32.gmra.mxu0 %v216
    %v302 = vpop.f32.mrf.mxu0
    %v303 = vadd.f32 0.0, %v302
    %v304 = vpop.f32.mrf.mxu0
    %v305 = vadd.f32 0.0, %v304
    %306 = vdwg.mxu0
    %v307 = vld [vmem:[%s3] sm:$0xff]
    %v308 = vld [vmem:[%s3 + $0x8] sm:$0xff]
    %v309 = vld [vmem:[%s3 + $0x10] sm:$0xff]
    %v310 = vld [vmem:[%s3 + $0x18] sm:$0xff]
    %v311 = vld [vmem:[%s3 + $0x20] sm:$0xff]
    %v312 = vld [vmem:[%s3 + $0x28] sm:$0xff]
    %v313 = vld [vmem:[%s3 + $0x30] sm:$0xff]
    %v314 = vld [vmem:[%s3 + $0x38] sm:$0xff]
    %v315 = vlaneseq
    %v316 = vshrl.u32 %v315, 7
    %v317 = vsub.s32 0, %v316
    %v318 = vrot.slane %v60, %v317
    %v319 = vadd.f32 %v285, %v318
    %v320 = vadd.f32 %v291, %v318
    %v321 = vxor.u32 %v319, 2147483648
    %v322 = vxor.u32 %v320, 2147483648
    %v323 = vmul.f32 %v321, 1.442695
    %v324 = vpow.pop %v323
    %v325 = vmul.f32 %v322, 1.442695
    %v326 = vpow.pop %v325
    %v327 = vadd.f32 %v324, 1.0
    %v328 = vadd.f32 %v326, 1.0
    %v329 = vrcp.pop %v327
    %v330 = vmul.f32 1.0, %v329
    %v331 = vrcp.pop %v328
    %v332 = vmul.f32 1.0, %v331
    %v333 = vtanh.pop %v319
    %v334 = vtanh.pop %v320
    %v335 = vmul.f32 %v330, 0.0
    %v336 = vmul.f32 %v332, 0.0
    %339 = vrot.lane.b32.xlu0 %v333, 64
    %v340 = vpop.permute.xlu0 %339
    %341 = vrot.lane.b32.xlu0 %v334, 64
    %v342 = vpop.permute.xlu0 %341
    %v345 = vmul.f32 %v330, %v340
    %v346 = vmul.f32 %v332, %v342
    %349 = vrot.lane.b32.xlu0 %v345, 32
    %v350 = vpop.permute.xlu0 %349
    %351 = vrot.lane.b32.xlu0 %v346, 32
    %v352 = vpop.permute.xlu0 %351
    %v355 = vadd.f32 %v335, %v350
    %v356 = vadd.f32 %v336, %v352
    %v357 = vtanh.pop %v355
    %v358 = vtanh.pop %v356
    %361 = vrot.lane.b32.xlu0 %v357, 64
    %v362 = vpop.permute.xlu0 %361
    %363 = vrot.lane.b32.xlu0 %v358, 64
    %v364 = vpop.permute.xlu0 %363
    %v367 = vmul.f32 %v330, %v362
    %v368 = vmul.f32 %v332, %v364
    %v369 = vlaneseq
    %v370 = vshrl.u32 %v369, 7
    %v371 = vsub.s32 1, %v370
    %v372 = vrot.slane %v60, %v371
    %v373 = vadd.f32 %v299, %v372
    %v374 = vadd.f32 %v305, %v372
    %v375 = vxor.u32 %v373, 2147483648
    %v376 = vxor.u32 %v374, 2147483648
    %v377 = vmul.f32 %v375, 1.442695
    %v378 = vpow.pop %v377
    %v379 = vmul.f32 %v376, 1.442695
    %v380 = vpow.pop %v379
    %v381 = vadd.f32 %v378, 1.0
    %v382 = vadd.f32 %v380, 1.0
    %v383 = vrcp.pop %v381
    %v384 = vmul.f32 1.0, %v383
    %v385 = vrcp.pop %v382
    %v386 = vmul.f32 1.0, %v385
    %v387 = vtanh.pop %v373
    %v388 = vtanh.pop %v374
    %v389 = vmul.f32 %v384, 0.0
    %v390 = vmul.f32 %v386, 0.0
    %393 = vrot.lane.b32.xlu0 %v387, 64
    %v394 = vpop.permute.xlu0 %393
    %395 = vrot.lane.b32.xlu0 %v388, 64
    %v396 = vpop.permute.xlu0 %395
    %v399 = vmul.f32 %v384, %v394
    %v400 = vmul.f32 %v386, %v396
    %403 = vrot.lane.b32.xlu0 %v399, 32
    %v404 = vpop.permute.xlu0 %403
    %405 = vrot.lane.b32.xlu0 %v400, 32
    %v406 = vpop.permute.xlu0 %405
    %v409 = vadd.f32 %v389, %v404
    %v410 = vadd.f32 %v390, %v406
    %v411 = vtanh.pop %v409
    %v412 = vtanh.pop %v410
    %415 = vrot.lane.b32.xlu0 %v411, 64
    %v416 = vpop.permute.xlu0 %415
    %417 = vrot.lane.b32.xlu0 %v412, 64
    %v418 = vpop.permute.xlu0 %417
    %v421 = vmul.f32 %v384, %v416
    %v422 = vmul.f32 %v386, %v418
    %v423 = vadd.f32 %v297, %v318
    %v424 = vadd.f32 %v303, %v318
    %427 = vrot.lane.b32.xlu0 %v367, 32
    %v428 = vpop.permute.xlu0 %427
    %429 = vrot.lane.b32.xlu0 %v368, 32
    %v430 = vpop.permute.xlu0 %429
    %v431 = vsel %vm205, %v428, 0
    %v433 = vsel %vm205, %v430, 0
    %435 = vmatprep.subr.mxu0 0.0
    %436 = vmatpush1.msra.mxu0 0.0
    %437 = vmatprep.subr.mxu0 0.0
    %438 = vmatpush1.msra.mxu0 0.0
    %439 = vmatprep.subr.mxu0 0.0
    %440 = vmatpush1.msra.mxu0 0.0
    %441 = vmatprep.subr.mxu0 0.0
    %442 = vmatpush1.msra.mxu0 0.0
    %443 = vmatprep.subr.mxu0 0.0
    %444 = vmatpush1.msra.mxu0 0.0
    %445 = vmatprep.subr.mxu0 0.0
    %446 = vmatpush1.msra.mxu0 0.0
    %447 = vmatprep.subr.mxu0 0.0
    %448 = vmatpush1.msra.mxu0 0.0
    %449 = vmatprep.subr.mxu0 0.0
    %450 = vmatpush1.msra.mxu0 0.0
    %451 = vmatprep.subr.mxu0 0.0
    %452 = vmatpush1.msra.mxu0 0.0
    %453 = vmatprep.subr.mxu0 0.0
    %454 = vmatpush1.msra.mxu0 0.0
    %455 = vmatprep.subr.mxu0 0.0
    %456 = vmatpush1.msra.mxu0 0.0
    %457 = vmatprep.subr.mxu0 0.0
    %458 = vmatpush1.msra.mxu0 0.0
    %459 = vmatprep.subr.mxu0 0.0
    %460 = vmatpush1.msra.mxu0 %v313
    %461 = vmatprep.subr.mxu0 0.0
    %462 = vmatpush1.msra.mxu0 %v311
    %463 = vmatprep.subr.mxu0 0.0
    %464 = vmatpush1.msra.mxu0 %v309
    %465 = vmatprep.subr.mxu0 0.0
    %466 = vmatpush1.msra.mxu0 %v307
    %467 = vmatprep.subr.mxu0 0.0
    %468 = vmatpush2.msra.mxu0 0.0
    %469 = vmatprep.subr.mxu0 0.0
    %470 = vmatpush2.msra.mxu0 0.0
    %471 = vmatprep.subr.mxu0 0.0
    %472 = vmatpush2.msra.mxu0 0.0
    %473 = vmatprep.subr.mxu0 0.0
    %474 = vmatpush2.msra.mxu0 0.0
    %475 = vmatprep.subr.mxu0 0.0
    %476 = vmatpush2.msra.mxu0 0.0
    %477 = vmatprep.subr.mxu0 0.0
    %478 = vmatpush2.msra.mxu0 0.0
    %479 = vmatprep.subr.mxu0 0.0
    %480 = vmatpush2.msra.mxu0 0.0
    %481 = vmatprep.subr.mxu0 0.0
    %482 = vmatpush2.msra.mxu0 0.0
    %483 = vmatprep.subr.mxu0 0.0
    %484 = vmatpush2.msra.mxu0 0.0
    %485 = vmatprep.subr.mxu0 0.0
    %486 = vmatpush2.msra.mxu0 0.0
    %487 = vmatprep.subr.mxu0 0.0
    %488 = vmatpush2.msra.mxu0 0.0
    %489 = vmatprep.subr.mxu0 0.0
    %490 = vmatpush2.msra.mxu0 0.0
    %491 = vmatprep.subr.mxu0 0.0
    %492 = vmatpush2.msra.mxu0 0.0
    %493 = vmatprep.subr.mxu0 0.0
    %494 = vmatpush2.msra.mxu0 0.0
    %495 = vmatprep.subr.mxu0 0.0
    %496 = vmatpush2.msra.mxu0 0.0
    %497 = vmatprep.subr.mxu0 0.0
    %498 = vmatpush2.msra.mxu0 0.0
    %499 = vmatprep.mubr.f32.mxu0 0.0
    %500 = vmatmul.mubr.f32.gmra.mxu0 %v431
    %v501 = vpop.f32.mrf.mxu0
    %v502 = vadd.f32 0.0, %v501
    %v503 = vpop.f32.mrf.mxu0
    %504 = vmatprep.mubr.f32.mxu0 0.0
    %505 = vmatmul.mubr.f32.gmra.mxu0 %v433
    %v506 = vpop.f32.mrf.mxu0
    %v507 = vadd.f32 0.0, %v506
    %v508 = vpop.f32.mrf.mxu0
    %509 = vdwg.mxu0
    %v510 = vadd.f32 %v423, %v502
    %v511 = vadd.f32 %v424, %v507
    %v512 = vxor.u32 %v510, 2147483648
    %v513 = vxor.u32 %v511, 2147483648
    %v514 = vmul.f32 %v512, 1.442695
    %v515 = vpow.pop %v514
    %v516 = vmul.f32 %v513, 1.442695
    %v517 = vpow.pop %v516
    %v518 = vadd.f32 %v515, 1.0
    %v519 = vadd.f32 %v517, 1.0
    %v520 = vrcp.pop %v518
    %v521 = vmul.f32 1.0, %v520
    %v522 = vrcp.pop %v519
    %v523 = vmul.f32 1.0, %v522
    %v524 = vtanh.pop %v510
    %v525 = vtanh.pop %v511
    %v526 = vmul.f32 %v521, %v355
    %v527 = vmul.f32 %v523, %v356
    %530 = vrot.lane.b32.xlu0 %v524, 64
    %v531 = vpop.permute.xlu0 %530
    %532 = vrot.lane.b32.xlu0 %v525, 64
    %v533 = vpop.permute.xlu0 %532
    %v536 = vmul.f32 %v521, %v531
    %v537 = vmul.f32 %v523, %v533
    %540 = vrot.lane.b32.xlu0 %v536, 32
    %v541 = vpop.permute.xlu0 %540
    %542 = vrot.lane.b32.xlu0 %v537, 32
    %v543 = vpop.permute.xlu0 %542
    %v546 = vadd.f32 %v526, %v541
    %v547 = vadd.f32 %v527, %v543
    %v548 = vtanh.pop %v546
    %v549 = vtanh.pop %v547
    %552 = vrot.lane.b32.xlu0 %v548, 64
    %v553 = vpop.permute.xlu0 %552
    %554 = vrot.lane.b32.xlu0 %v549, 64
    %v555 = vpop.permute.xlu0 %554
    %v558 = vmul.f32 %v521, %v553
    %v559 = vmul.f32 %v523, %v555
    %v560 = vadd.f32 %v287, %v372
    %v561 = vadd.f32 %v293, %v372
    %564 = vrot.lane.b32.xlu0 %v421, 32
    %v565 = vpop.permute.xlu0 %564
    %566 = vrot.lane.b32.xlu0 %v422, 32
    %v567 = vpop.permute.xlu0 %566
    %v568 = vsel %vm205, %v565, 0
    %v570 = vsel %vm205, %v567, 0
    %572 = vmatprep.subr.mxu0 0.0
    %573 = vmatpush1.msra.mxu0 0.0
    %574 = vmatprep.subr.mxu0 0.0
    %575 = vmatpush1.msra.mxu0 0.0
    %576 = vmatprep.subr.mxu0 0.0
    %577 = vmatpush1.msra.mxu0 0.0
    %578 = vmatprep.subr.mxu0 0.0
    %579 = vmatpush1.msra.mxu0 0.0
    %580 = vmatprep.subr.mxu0 0.0
    %581 = vmatpush1.msra.mxu0 0.0
    %582 = vmatprep.subr.mxu0 0.0
    %583 = vmatpush1.msra.mxu0 0.0
    %584 = vmatprep.subr.mxu0 0.0
    %585 = vmatpush1.msra.mxu0 0.0
    %586 = vmatprep.subr.mxu0 0.0
    %587 = vmatpush1.msra.mxu0 0.0
    %588 = vmatprep.subr.mxu0 0.0
    %589 = vmatpush1.msra.mxu0 0.0
    %590 = vmatprep.subr.mxu0 0.0
    %591 = vmatpush1.msra.mxu0 0.0
    %592 = vmatprep.subr.mxu0 0.0
    %593 = vmatpush1.msra.mxu0 0.0
    %594 = vmatprep.subr.mxu0 0.0
    %595 = vmatpush1.msra.mxu0 0.0
    %596 = vmatprep.subr.mxu0 0.0
    %597 = vmatpush1.msra.mxu0 %v314
    %598 = vmatprep.subr.mxu0 0.0
    %599 = vmatpush1.msra.mxu0 %v312
    %600 = vmatprep.subr.mxu0 0.0
    %601 = vmatpush1.msra.mxu0 %v310
    %602 = vmatprep.subr.mxu0 0.0
    %603 = vmatpush1.msra.mxu0 %v308
    %604 = vmatprep.subr.mxu0 0.0
    %605 = vmatpush2.msra.mxu0 0.0
    %606 = vmatprep.subr.mxu0 0.0
    %607 = vmatpush2.msra.mxu0 0.0
    %608 = vmatprep.subr.mxu0 0.0
    %609 = vmatpush2.msra.mxu0 0.0
    %610 = vmatprep.subr.mxu0 0.0
    %611 = vmatpush2.msra.mxu0 0.0
    %612 = vmatprep.subr.mxu0 0.0
    %613 = vmatpush2.msra.mxu0 0.0
    %614 = vmatprep.subr.mxu0 0.0
    %615 = vmatpush2.msra.mxu0 0.0
    %616 = vmatprep.subr.mxu0 0.0
    %617 = vmatpush2.msra.mxu0 0.0
    %618 = vmatprep.subr.mxu0 0.0
    %619 = vmatpush2.msra.mxu0 0.0
    %620 = vmatprep.subr.mxu0 0.0
    %621 = vmatpush2.msra.mxu0 0.0
    %622 = vmatprep.subr.mxu0 0.0
    %623 = vmatpush2.msra.mxu0 0.0
    %624 = vmatprep.subr.mxu0 0.0
    %625 = vmatpush2.msra.mxu0 0.0
    %626 = vmatprep.subr.mxu0 0.0
    %627 = vmatpush2.msra.mxu0 0.0
    %628 = vmatprep.subr.mxu0 0.0
    %629 = vmatpush2.msra.mxu0 0.0
    %630 = vmatprep.subr.mxu0 0.0
    %631 = vmatpush2.msra.mxu0 0.0
    %632 = vmatprep.subr.mxu0 0.0
    %633 = vmatpush2.msra.mxu0 0.0
    %634 = vmatprep.subr.mxu0 0.0
    %635 = vmatpush2.msra.mxu0 0.0
    %636 = vmatprep.mubr.f32.mxu0 0.0
    %637 = vmatmul.mubr.f32.gmra.mxu0 %v568
    %v638 = vpop.f32.mrf.mxu0
    %v639 = vadd.f32 0.0, %v638
    %v640 = vpop.f32.mrf.mxu0
    %641 = vmatprep.mubr.f32.mxu0 0.0
    %642 = vmatmul.mubr.f32.gmra.mxu0 %v570
    %v643 = vpop.f32.mrf.mxu0
    %v644 = vadd.f32 0.0, %v643
    %v645 = vpop.f32.mrf.mxu0
    %646 = vdwg.mxu0
    %v647 = vadd.f32 %v560, %v639
    %v648 = vadd.f32 %v561, %v644
    %v649 = vxor.u32 %v647, 2147483648
    %v650 = vxor.u32 %v648, 2147483648
    %v651 = vmul.f32 %v649, 1.442695
    %v652 = vpow.pop %v651
    %v653 = vmul.f32 %v650, 1.442695
    %v654 = vpow.pop %v653
    %v655 = vadd.f32 %v652, 1.0
    %v656 = vadd.f32 %v654, 1.0
    %v657 = vrcp.pop %v655
    %v658 = vmul.f32 1.0, %v657
    %v659 = vrcp.pop %v656
    %v660 = vmul.f32 1.0, %v659
    %v661 = vtanh.pop %v647
    %v662 = vtanh.pop %v648
    %v663 = vmul.f32 %v658, %v409
    %v664 = vmul.f32 %v660, %v410
    %667 = vrot.lane.b32.xlu0 %v661, 64
    %v668 = vpop.permute.xlu0 %667
    %669 = vrot.lane.b32.xlu0 %v662, 64
    %v670 = vpop.permute.xlu0 %669
    %v673 = vmul.f32 %v658, %v668
    %v674 = vmul.f32 %v660, %v670
    %677 = vrot.lane.b32.xlu0 %v673, 32
    %v678 = vpop.permute.xlu0 %677
    %679 = vrot.lane.b32.xlu0 %v674, 32
    %v680 = vpop.permute.xlu0 %679
    %v683 = vadd.f32 %v663, %v678
    %v684 = vadd.f32 %v664, %v680
    %v685 = vtanh.pop %v683
    %v686 = vtanh.pop %v684
    %689 = vrot.lane.b32.xlu0 %v685, 64
    %v690 = vpop.permute.xlu0 %689
    %691 = vrot.lane.b32.xlu0 %v686, 64
    %v692 = vpop.permute.xlu0 %691
    %v695 = vmul.f32 %v658, %v690
    %v696 = vmul.f32 %v660, %v692
    %699 = vrot.lane.b32.xlu0 %v558, 32
    %v700 = vpop.permute.xlu0 %699
    %701 = vrot.lane.b32.xlu0 %v559, 32
    %v702 = vpop.permute.xlu0 %701
    %709 = vrot.lane.b32.xlu0 %v695, 64
    %v710 = vpop.permute.xlu0 %709
    %711 = vrot.lane.b32.xlu0 %v696, 64
    %v712 = vpop.permute.xlu0 %711
    %713 = vrot.lane.b32.xlu0 %v421, 64
    %v714 = vpop.permute.xlu0 %713
    %715 = vrot.lane.b32.xlu0 %v422, 64
    %v716 = vpop.permute.xlu0 %715
    %v721 = vsel %vm205, %v428, %v710
    %v722 = vsel %vm205, %v430, %v712
    %v723 = vsel %vm205, %v700, %v714
    %v724 = vsel %vm205, %v702, %v716
    %v725 = vld [vmem:[#allocation2] sm:$0xff]
    %v726 = vld [vmem:[#allocation2 + $0x8] sm:$0xff]
    %v727 = vld [vmem:[#allocation2 + $0x10] sm:$0xff]
    %v728 = vld [vmem:[#allocation2 + $0x18] sm:$0xff]
    %v729 = vld [vmem:[#allocation2 + $0x20] sm:$0xff]
    %v730 = vld [vmem:[#allocation2 + $0x28] sm:$0xff]
    %v731 = vld [vmem:[#allocation2 + $0x30] sm:$0xff]
    %v732 = vld [vmem:[#allocation2 + $0x38] sm:$0xff]
    %v733 = vlaneseq
    %v734 = vshrl.u32 %v733, 7
    %v735 = vsub.s32 2, %v734
    %v736 = vrot.slane %v60, %v735
    %v738 = vsel %vm99, %v721, 0
    %v741 = vsel %vm99, %v722, 0
    %v744 = vsel %vm99, %v723, 0
    %v747 = vsel %vm99, %v724, 0
    %749 = vmatprep.subr.mxu0 0.0
    %750 = vmatpush1.msra.mxu0 0.0
    %751 = vmatprep.subr.mxu0 0.0
    %752 = vmatpush1.msra.mxu0 0.0
    %753 = vmatprep.subr.mxu0 0.0
    %754 = vmatpush1.msra.mxu0 0.0
    %755 = vmatprep.subr.mxu0 0.0
    %756 = vmatpush1.msra.mxu0 0.0
    %757 = vmatprep.subr.mxu0 0.0
    %758 = vmatpush1.msra.mxu0 0.0
    %759 = vmatprep.subr.mxu0 0.0
    %760 = vmatpush1.msra.mxu0 0.0
    %761 = vmatprep.subr.mxu0 0.0
    %762 = vmatpush1.msra.mxu0 0.0
    %763 = vmatprep.subr.mxu0 0.0
    %764 = vmatpush1.msra.mxu0 0.0
    %765 = vmatprep.subr.mxu0 0.0
    %766 = vmatpush1.msra.mxu0 %v732
    %767 = vmatprep.subr.mxu0 0.0
    %768 = vmatpush1.msra.mxu0 %v731
    %769 = vmatprep.subr.mxu0 0.0
    %770 = vmatpush1.msra.mxu0 %v730
    %771 = vmatprep.subr.mxu0 0.0
    %772 = vmatpush1.msra.mxu0 %v729
    %773 = vmatprep.subr.mxu0 0.0
    %774 = vmatpush1.msra.mxu0 %v728
    %775 = vmatprep.subr.mxu0 0.0
    %776 = vmatpush1.msra.mxu0 %v727
    %777 = vmatprep.subr.mxu0 0.0
    %778 = vmatpush1.msra.mxu0 %v726
    %779 = vmatprep.subr.mxu0 0.0
    %780 = vmatpush1.msra.mxu0 %v725
    %781 = vmatprep.subr.mxu0 0.0
    %782 = vmatpush2.msra.mxu0 0.0
    %783 = vmatprep.subr.mxu0 0.0
    %784 = vmatpush2.msra.mxu0 0.0
    %785 = vmatprep.subr.mxu0 0.0
    %786 = vmatpush2.msra.mxu0 0.0
    %787 = vmatprep.subr.mxu0 0.0
    %788 = vmatpush2.msra.mxu0 0.0
    %789 = vmatprep.subr.mxu0 0.0
    %790 = vmatpush2.msra.mxu0 0.0
    %791 = vmatprep.subr.mxu0 0.0
    %792 = vmatpush2.msra.mxu0 0.0
    %793 = vmatprep.subr.mxu0 0.0
    %794 = vmatpush2.msra.mxu0 0.0
    %795 = vmatprep.subr.mxu0 0.0
    %796 = vmatpush2.msra.mxu0 0.0
    %797 = vmatprep.subr.mxu0 0.0
    %798 = vmatpush2.msra.mxu0 0.0
    %799 = vmatprep.subr.mxu0 0.0
    %800 = vmatpush2.msra.mxu0 0.0
    %801 = vmatprep.subr.mxu0 0.0
    %802 = vmatpush2.msra.mxu0 0.0
    %803 = vmatprep.subr.mxu0 0.0
    %804 = vmatpush2.msra.mxu0 0.0
    %805 = vmatprep.subr.mxu0 0.0
    %806 = vmatpush2.msra.mxu0 0.0
    %807 = vmatprep.subr.mxu0 0.0
    %808 = vmatpush2.msra.mxu0 0.0
    %809 = vmatprep.subr.mxu0 0.0
    %810 = vmatpush2.msra.mxu0 0.0
    %811 = vmatprep.subr.mxu0 0.0
    %812 = vmatpush2.msra.mxu0 0.0
    %813 = vmatprep.mubr.f32.mxu0 0.0
    %814 = vmatmul.mubr.f32.gmra.mxu0 %v738
    %v815 = vpop.f32.mrf.mxu0
    %v816 = vadd.f32 %v736, %v815
    %v817 = vpop.f32.mrf.mxu0
    %818 = vmatprep.mubr.f32.mxu0 0.0
    %819 = vmatmul.mubr.f32.gmra.mxu0 %v741
    %v820 = vpop.f32.mrf.mxu0
    %v821 = vpop.f32.mrf.mxu0
    %822 = vmatprep.mubr.f32.mxu0 0.0
    %823 = vmatmul.mubr.f32.gmra.mxu0 %v744
    %v824 = vpop.f32.mrf.mxu0
    %v825 = vadd.f32 %v736, %v824
    %v826 = vpop.f32.mrf.mxu0
    %827 = vmatprep.mubr.f32.mxu0 0.0
    %828 = vmatmul.mubr.f32.gmra.mxu0 %v747
    %v829 = vpop.f32.mrf.mxu0
    %v830 = vpop.f32.mrf.mxu0
    %831 = vdwg.mxu0
    %v833 = vsel %vm99, %v816, 0
    %835 = vmatprep.subr.mxu0 0.0
    %836 = vmatpush1.xpose.msra.mxu0 0.0
    %837 = vmatprep.subr.mxu0 0.0
    %838 = vmatpush1.xpose.msra.mxu0 0.0
    %839 = vmatprep.subr.mxu0 0.0
    %840 = vmatpush1.xpose.msra.mxu0 0.0
    %841 = vmatprep.subr.mxu0 0.0
    %842 = vmatpush1.xpose.msra.mxu0 0.0
    %843 = vmatprep.subr.mxu0 0.0
    %844 = vmatpush1.xpose.msra.mxu0 0.0
    %845 = vmatprep.subr.mxu0 0.0
    %846 = vmatpush1.xpose.msra.mxu0 0.0
    %847 = vmatprep.subr.mxu0 0.0
    %848 = vmatpush1.xpose.msra.mxu0 0.0
    %849 = vmatprep.subr.mxu0 0.0
    %850 = vmatpush1.xpose.msra.mxu0 0.0
    %851 = vmatprep.subr.mxu0 0.0
    %852 = vmatpush1.xpose.msra.mxu0 0.0
    %853 = vmatprep.subr.mxu0 0.0
    %854 = vmatpush1.xpose.msra.mxu0 0.0
    %855 = vmatprep.subr.mxu0 0.0
    %856 = vmatpush1.xpose.msra.mxu0 0.0
    %857 = vmatprep.subr.mxu0 0.0
    %858 = vmatpush1.xpose.msra.mxu0 0.0
    %859 = vmatprep.subr.mxu0 0.0
    %860 = vmatpush1.xpose.msra.mxu0 0.0
    %861 = vmatprep.subr.mxu0 0.0
    %862 = vmatpush1.xpose.msra.mxu0 0.0
    %863 = vmatprep.subr.mxu0 0.0
    %864 = vmatpush1.xpose.msra.mxu0 0.0
    %865 = vmatprep.subr.mxu0 0.0
    %866 = vmatpush1.xpose.msra.mxu0 %v833
    %867 = vmatprep.subr.mxu0 0.0
    %868 = vmatpush2.xpose.msra.mxu0 0.0
    %869 = vmatprep.subr.mxu0 0.0
    %870 = vmatpush2.xpose.msra.mxu0 0.0
    %871 = vmatprep.subr.mxu0 0.0
    %872 = vmatpush2.xpose.msra.mxu0 0.0
    %873 = vmatprep.subr.mxu0 0.0
    %874 = vmatpush2.xpose.msra.mxu0 0.0
    %875 = vmatprep.subr.mxu0 0.0
    %876 = vmatpush2.xpose.msra.mxu0 0.0
    %877 = vmatprep.subr.mxu0 0.0
    %878 = vmatpush2.xpose.msra.mxu0 0.0
    %879 = vmatprep.subr.mxu0 0.0
    %880 = vmatpush2.xpose.msra.mxu0 0.0
    %881 = vmatprep.subr.mxu0 0.0
    %882 = vmatpush2.xpose.msra.mxu0 0.0
    %883 = vmatprep.subr.mxu0 0.0
    %884 = vmatpush2.xpose.msra.mxu0 0.0
    %885 = vmatprep.subr.mxu0 0.0
    %886 = vmatpush2.xpose.msra.mxu0 0.0
    %887 = vmatprep.subr.mxu0 0.0
    %888 = vmatpush2.xpose.msra.mxu0 0.0
    %889 = vmatprep.subr.mxu0 0.0
    %890 = vmatpush2.xpose.msra.mxu0 0.0
    %891 = vmatprep.subr.mxu0 0.0
    %892 = vmatpush2.xpose.msra.mxu0 0.0
    %893 = vmatprep.subr.mxu0 0.0
    %894 = vmatpush2.xpose.msra.mxu0 0.0
    %895 = vmatprep.subr.mxu0 0.0
    %896 = vmatpush2.xpose.msra.mxu0 0.0
    %897 = vmatprep.subr.mxu0 0.0
    %898 = vmatpush2.xpose.msra.mxu0 0.0
    %899 = vmatprep.mubr.f32.mxu0 0.0
    %900 = vmatmul.mubr.f32.gmra.mxu0 %v741
    %v901 = vpop.f32.mrf.mxu0
    %v902 = vadd.f32 0.0, %v901
    %v903 = vpop.f32.mrf.mxu0
    %904 = vdwg.mxu0
    %v906 = vsel %vm99, %v825, 0
    %908 = vmatprep.subr.mxu0 0.0
    %909 = vmatpush1.xpose.msra.mxu0 0.0
    %910 = vmatprep.subr.mxu0 0.0
    %911 = vmatpush1.xpose.msra.mxu0 0.0
    %912 = vmatprep.subr.mxu0 0.0
    %913 = vmatpush1.xpose.msra.mxu0 0.0
    %914 = vmatprep.subr.mxu0 0.0
    %915 = vmatpush1.xpose.msra.mxu0 0.0
    %916 = vmatprep.subr.mxu0 0.0
    %917 = vmatpush1.xpose.msra.mxu0 0.0
    %918 = vmatprep.subr.mxu0 0.0
    %919 = vmatpush1.xpose.msra.mxu0 0.0
    %920 = vmatprep.subr.mxu0 0.0
    %921 = vmatpush1.xpose.msra.mxu0 0.0
    %922 = vmatprep.subr.mxu0 0.0
    %923 = vmatpush1.xpose.msra.mxu0 0.0
    %924 = vmatprep.subr.mxu0 0.0
    %925 = vmatpush1.xpose.msra.mxu0 0.0
    %926 = vmatprep.subr.mxu0 0.0
    %927 = vmatpush1.xpose.msra.mxu0 0.0
    %928 = vmatprep.subr.mxu0 0.0
    %929 = vmatpush1.xpose.msra.mxu0 0.0
    %930 = vmatprep.subr.mxu0 0.0
    %931 = vmatpush1.xpose.msra.mxu0 0.0
    %932 = vmatprep.subr.mxu0 0.0
    %933 = vmatpush1.xpose.msra.mxu0 0.0
    %934 = vmatprep.subr.mxu0 0.0
    %935 = vmatpush1.xpose.msra.mxu0 0.0
    %936 = vmatprep.subr.mxu0 0.0
    %937 = vmatpush1.xpose.msra.mxu0 0.0
    %938 = vmatprep.subr.mxu0 0.0
    %939 = vmatpush1.xpose.msra.mxu0 %v906
    %940 = vmatprep.subr.mxu0 0.0
    %941 = vmatpush2.xpose.msra.mxu0 0.0
    %942 = vmatprep.subr.mxu0 0.0
    %943 = vmatpush2.xpose.msra.mxu0 0.0
    %944 = vmatprep.subr.mxu0 0.0
    %945 = vmatpush2.xpose.msra.mxu0 0.0
    %946 = vmatprep.subr.mxu0 0.0
    %947 = vmatpush2.xpose.msra.mxu0 0.0
    %948 = vmatprep.subr.mxu0 0.0
    %949 = vmatpush2.xpose.msra.mxu0 0.0
    %950 = vmatprep.subr.mxu0 0.0
    %951 = vmatpush2.xpose.msra.mxu0 0.0
    %952 = vmatprep.subr.mxu0 0.0
    %953 = vmatpush2.xpose.msra.mxu0 0.0
    %954 = vmatprep.subr.mxu0 0.0
    %955 = vmatpush2.xpose.msra.mxu0 0.0
    %956 = vmatprep.subr.mxu0 0.0
    %957 = vmatpush2.xpose.msra.mxu0 0.0
    %958 = vmatprep.subr.mxu0 0.0
    %959 = vmatpush2.xpose.msra.mxu0 0.0
    %960 = vmatprep.subr.mxu0 0.0
    %961 = vmatpush2.xpose.msra.mxu0 0.0
    %962 = vmatprep.subr.mxu0 0.0
    %963 = vmatpush2.xpose.msra.mxu0 0.0
    %964 = vmatprep.subr.mxu0 0.0
    %965 = vmatpush2.xpose.msra.mxu0 0.0
    %966 = vmatprep.subr.mxu0 0.0
    %967 = vmatpush2.xpose.msra.mxu0 0.0
    %968 = vmatprep.subr.mxu0 0.0
    %969 = vmatpush2.xpose.msra.mxu0 0.0
    %970 = vmatprep.subr.mxu0 0.0
    %971 = vmatpush2.xpose.msra.mxu0 0.0
    %972 = vmatprep.mubr.f32.mxu0 0.0
    %973 = vmatmul.mubr.f32.gmra.mxu0 %v747
    %v974 = vpop.f32.mrf.mxu0
    %v975 = vadd.f32 0.0, %v974
    %v976 = vpop.f32.mrf.mxu0
    %977 = vdwg.mxu0
    %vm978 = vcmask 64512
    %v979 = vsel %vm978, %v902, -inf
    %v980 = vrot.slane %v979, 4
    %v981 = vmax.f32 %v979, %v980
    %v982 = vrot.slane %v981, 2
    %v983 = vmax.f32 %v981, %v982
    %v984 = vrot.slane %v983, 1
    %v985 = vmax.f32 %v983, %v984
    %v986 = vsel %vm978, %v975, -inf
    %v987 = vrot.slane %v986, 4
    %v988 = vmax.f32 %v986, %v987
    %v989 = vrot.slane %v988, 2
    %v990 = vmax.f32 %v988, %v989
    %v991 = vrot.slane %v990, 1
    %v992 = vmax.f32 %v990, %v991
    %v993 = vsub.f32 %v902, %v985
    %v994 = vsub.f32 %v975, %v992
    %v995 = vmul.f32 %v993, 1.442695
    %v996 = vpow.pop %v995
    %v997 = vmul.f32 %v994, 1.442695
    %v998 = vpow.pop %v997
    %v999 = vsel %vm978, %v996, 0.0
    %v1000 = vrot.slane %v999, 4
    %v1001 = vadd.f32 %v999, %v1000
    %v1002 = vrot.slane %v1001, 2
    %v1003 = vadd.f32 %v1001, %v1002
    %v1004 = vrot.slane %v1003, 1
    %v1005 = vadd.f32 %v1003, %v1004
    %v1006 = vsel %vm978, %v998, 0.0
    %v1007 = vrot.slane %v1006, 4
    %v1008 = vadd.f32 %v1006, %v1007
    %v1009 = vrot.slane %v1008, 2
    %v1010 = vadd.f32 %v1008, %v1009
    %v1011 = vrot.slane %v1010, 1
    %v1012 = vadd.f32 %v1010, %v1011
    %v1013 = vrcp.pop %v1005
    %v1014 = vmul.f32 %v996, %v1013
    %v1015 = vrcp.pop %v1012
    %v1016 = vmul.f32 %v998, %v1015
    %v1018 = vsel %vm978, %v1014, 0
    %1020 = vmatprep.subr.mxu0 0.0
    %1021 = vmatpush1.msra.mxu0 0.0
    %1022 = vmatprep.subr.mxu0 0.0
    %1023 = vmatpush1.msra.mxu0 0.0
    %1024 = vmatprep.subr.mxu0 0.0
    %1025 = vmatpush1.msra.mxu0 0.0
    %1026 = vmatprep.subr.mxu0 0.0
    %1027 = vmatpush1.msra.mxu0 0.0
    %1028 = vmatprep.subr.mxu0 0.0
    %1029 = vmatpush1.msra.mxu0 0.0
    %1030 = vmatprep.subr.mxu0 0.0
    %1031 = vmatpush1.msra.mxu0 0.0
    %1032 = vmatprep.subr.mxu0 0.0
    %1033 = vmatpush1.msra.mxu0 0.0
    %1034 = vmatprep.subr.mxu0 0.0
    %1035 = vmatpush1.msra.mxu0 0.0
    %1036 = vmatprep.subr.mxu0 0.0
    %1037 = vmatpush1.msra.mxu0 0.0
    %1038 = vmatprep.subr.mxu0 0.0
    %1039 = vmatpush1.msra.mxu0 0.0
    %1040 = vmatprep.subr.mxu0 0.0
    %1041 = vmatpush1.msra.mxu0 0.0
    %1042 = vmatprep.subr.mxu0 0.0
    %1043 = vmatpush1.msra.mxu0 0.0
    %1044 = vmatprep.subr.mxu0 0.0
    %1045 = vmatpush1.msra.mxu0 0.0
    %1046 = vmatprep.subr.mxu0 0.0
    %1047 = vmatpush1.msra.mxu0 0.0
    %1048 = vmatprep.subr.mxu0 0.0
    %1049 = vmatpush1.msra.mxu0 0.0
    %1050 = vmatprep.subr.mxu0 0.0
    %1051 = vmatpush1.msra.mxu0 %v721
    %1052 = vmatprep.subr.mxu0 0.0
    %1053 = vmatpush2.msra.mxu0 0.0
    %1054 = vmatprep.subr.mxu0 0.0
    %1055 = vmatpush2.msra.mxu0 0.0
    %1056 = vmatprep.subr.mxu0 0.0
    %1057 = vmatpush2.msra.mxu0 0.0
    %1058 = vmatprep.subr.mxu0 0.0
    %1059 = vmatpush2.msra.mxu0 0.0
    %1060 = vmatprep.subr.mxu0 0.0
    %1061 = vmatpush2.msra.mxu0 0.0
    %1062 = vmatprep.subr.mxu0 0.0
    %1063 = vmatpush2.msra.mxu0 0.0
    %1064 = vmatprep.subr.mxu0 0.0
    %1065 = vmatpush2.msra.mxu0 0.0
    %1066 = vmatprep.subr.mxu0 0.0
    %1067 = vmatpush2.msra.mxu0 0.0
    %1068 = vmatprep.subr.mxu0 0.0
    %1069 = vmatpush2.msra.mxu0 0.0
    %1070 = vmatprep.subr.mxu0 0.0
    %1071 = vmatpush2.msra.mxu0 0.0
    %1072 = vmatprep.subr.mxu0 0.0
    %1073 = vmatpush2.msra.mxu0 0.0
    %1074 = vmatprep.subr.mxu0 0.0
    %1075 = vmatpush2.msra.mxu0 0.0
    %1076 = vmatprep.subr.mxu0 0.0
    %1077 = vmatpush2.msra.mxu0 0.0
    %1078 = vmatprep.subr.mxu0 0.0
    %1079 = vmatpush2.msra.mxu0 0.0
    %1080 = vmatprep.subr.mxu0 0.0
    %1081 = vmatpush2.msra.mxu0 0.0
    %1082 = vmatprep.subr.mxu0 0.0
    %1083 = vmatpush2.msra.mxu0 0.0
    %1084 = vmatprep.mubr.f32.mxu0 0.0
    %1085 = vmatmul.mubr.f32.gmra.mxu0 %v1018
    %v1086 = vpop.f32.mrf.mxu0
    %v1087 = vadd.f32 0.0, %v1086
    %v1088 = vpop.f32.mrf.mxu0
    %1089 = vdwg.mxu0
    %v1091 = vsel %vm978, %v1016, 0
    %1093 = vmatprep.subr.mxu0 0.0
    %1094 = vmatpush1.msra.mxu0 0.0
    %1095 = vmatprep.subr.mxu0 0.0
    %1096 = vmatpush1.msra.mxu0 0.0
    %1097 = vmatprep.subr.mxu0 0.0
    %1098 = vmatpush1.msra.mxu0 0.0
    %1099 = vmatprep.subr.mxu0 0.0
    %1100 = vmatpush1.msra.mxu0 0.0
    %1101 = vmatprep.subr.mxu0 0.0
    %1102 = vmatpush1.msra.mxu0 0.0
    %1103 = vmatprep.subr.mxu0 0.0
    %1104 = vmatpush1.msra.mxu0 0.0
    %1105 = vmatprep.subr.mxu0 0.0
    %1106 = vmatpush1.msra.mxu0 0.0
    %1107 = vmatprep.subr.mxu0 0.0
    %1108 = vmatpush1.msra.mxu0 0.0
    %1109 = vmatprep.subr.mxu0 0.0
    %1110 = vmatpush1.msra.mxu0 0.0
    %1111 = vmatprep.subr.mxu0 0.0
    %1112 = vmatpush1.msra.mxu0 0.0
    %1113 = vmatprep.subr.mxu0 0.0
    %1114 = vmatpush1.msra.mxu0 0.0
    %1115 = vmatprep.subr.mxu0 0.0
    %1116 = vmatpush1.msra.mxu0 0.0
    %1117 = vmatprep.subr.mxu0 0.0
    %1118 = vmatpush1.msra.mxu0 0.0
    %1119 = vmatprep.subr.mxu0 0.0
    %1120 = vmatpush1.msra.mxu0 0.0
    %1121 = vmatprep.subr.mxu0 0.0
    %1122 = vmatpush1.msra.mxu0 0.0
    %1123 = vmatprep.subr.mxu0 0.0
    %1124 = vmatpush1.msra.mxu0 %v723
    %1125 = vmatprep.subr.mxu0 0.0
    %1126 = vmatpush2.msra.mxu0 0.0
    %1127 = vmatprep.subr.mxu0 0.0
    %1128 = vmatpush2.msra.mxu0 0.0
    %1129 = vmatprep.subr.mxu0 0.0
    %1130 = vmatpush2.msra.mxu0 0.0
    %1131 = vmatprep.subr.mxu0 0.0
    %1132 = vmatpush2.msra.mxu0 0.0
    %1133 = vmatprep.subr.mxu0 0.0
    %1134 = vmatpush2.msra.mxu0 0.0
    %1135 = vmatprep.subr.mxu0 0.0
    %1136 = vmatpush2.msra.mxu0 0.0
    %1137 = vmatprep.subr.mxu0 0.0
    %1138 = vmatpush2.msra.mxu0 0.0
    %1139 = vmatprep.subr.mxu0 0.0
    %1140 = vmatpush2.msra.mxu0 0.0
    %1141 = vmatprep.subr.mxu0 0.0
    %1142 = vmatpush2.msra.mxu0 0.0
    %1143 = vmatprep.subr.mxu0 0.0
    %1144 = vmatpush2.msra.mxu0 0.0
    %1145 = vmatprep.subr.mxu0 0.0
    %1146 = vmatpush2.msra.mxu0 0.0
    %1147 = vmatprep.subr.mxu0 0.0
    %1148 = vmatpush2.msra.mxu0 0.0
    %1149 = vmatprep.subr.mxu0 0.0
    %1150 = vmatpush2.msra.mxu0 0.0
    %1151 = vmatprep.subr.mxu0 0.0
    %1152 = vmatpush2.msra.mxu0 0.0
    %1153 = vmatprep.subr.mxu0 0.0
    %1154 = vmatpush2.msra.mxu0 0.0
    %1155 = vmatprep.subr.mxu0 0.0
    %1156 = vmatpush2.msra.mxu0 0.0
    %1157 = vmatprep.mubr.f32.mxu0 0.0
    %1158 = vmatmul.mubr.f32.gmra.mxu0 %v1091
    %v1159 = vpop.f32.mrf.mxu0
    %v1160 = vadd.f32 0.0, %v1159
    %v1161 = vpop.f32.mrf.mxu0
    %1162 = vdwg.mxu0
    %v1163 = vsub.f32 %v722, %v1087
    %v1164 = vsub.f32 %v724, %v1160
    %v1165 = vmul.f32 %v1163, %v1163
    %v1166 = vmul.f32 %v1164, %v1164
    %v1167 = vmul.f32 %v722, %v1087
    %v1168 = vmul.f32 %v724, %v1160
    %v1169 = vld [vmem:[%s5] sm:$0xff]
    %v1170 = vld [vmem:[%s5 + $0x8] sm:$0xff]
    %v1171 = vld [vmem:[%s5 + $0x10] sm:$0xff]
    %v1172 = vld [vmem:[%s5 + $0x18] sm:$0xff]
    %v1173 = vld [vmem:[%s5 + $0x20] sm:$0xff]
    %v1174 = vld [vmem:[%s5 + $0x28] sm:$0xff]
    %v1175 = vld [vmem:[%s5 + $0x30] sm:$0xff]
    %v1176 = vld [vmem:[%s5 + $0x38] sm:$0xff]
    %v1177 = vld [vmem:[%s5 + $0x40] sm:$0xff]
    %v1178 = vld [vmem:[%s5 + $0x48] sm:$0xff]
    %v1179 = vld [vmem:[%s5 + $0x50] sm:$0xff]
    %v1180 = vld [vmem:[%s5 + $0x58] sm:$0xff]
    %v1181 = vld [vmem:[%s5 + $0x60] sm:$0xff]
    %v1182 = vld [vmem:[%s5 + $0x68] sm:$0xff]
    %v1183 = vld [vmem:[%s5 + $0x70] sm:$0xff]
    %v1184 = vld [vmem:[%s5 + $0x78] sm:$0xff]
    %v1186 = vsel %vm99, %v1167, 0
    %v1189 = vsel %vm99, %v1168, 0
    %1191 = vmatprep.subr.mxu0 0.0
    %1192 = vmatpush1.msra.mxu0 0.0
    %1193 = vmatprep.subr.mxu0 0.0
    %1194 = vmatpush1.msra.mxu0 0.0
    %1195 = vmatprep.subr.mxu0 0.0
    %1196 = vmatpush1.msra.mxu0 0.0
    %1197 = vmatprep.subr.mxu0 0.0
    %1198 = vmatpush1.msra.mxu0 0.0
    %1199 = vmatprep.subr.mxu0 0.0
    %1200 = vmatpush1.msra.mxu0 0.0
    %1201 = vmatprep.subr.mxu0 0.0
    %1202 = vmatpush1.msra.mxu0 0.0
    %1203 = vmatprep.subr.mxu0 0.0
    %1204 = vmatpush1.msra.mxu0 0.0
    %1205 = vmatprep.subr.mxu0 0.0
    %1206 = vmatpush1.msra.mxu0 0.0
    %1207 = vmatprep.subr.mxu0 0.0
    %1208 = vmatpush1.msra.mxu0 %v1184
    %1209 = vmatprep.subr.mxu0 0.0
    %1210 = vmatpush1.msra.mxu0 %v1183
    %1211 = vmatprep.subr.mxu0 0.0
    %1212 = vmatpush1.msra.mxu0 %v1182
    %1213 = vmatprep.subr.mxu0 0.0
    %1214 = vmatpush1.msra.mxu0 %v1181
    %1215 = vmatprep.subr.mxu0 0.0
    %1216 = vmatpush1.msra.mxu0 %v1180
    %1217 = vmatprep.subr.mxu0 0.0
    %1218 = vmatpush1.msra.mxu0 %v1179
    %1219 = vmatprep.subr.mxu0 0.0
    %1220 = vmatpush1.msra.mxu0 %v1178
    %1221 = vmatprep.subr.mxu0 0.0
    %1222 = vmatpush1.msra.mxu0 %v1177
    %1223 = vmatprep.subr.mxu0 0.0
    %1224 = vmatpush2.msra.mxu0 0.0
    %1225 = vmatprep.subr.mxu0 0.0
    %1226 = vmatpush2.msra.mxu0 0.0
    %1227 = vmatprep.subr.mxu0 0.0
    %1228 = vmatpush2.msra.mxu0 0.0
    %1229 = vmatprep.subr.mxu0 0.0
    %1230 = vmatpush2.msra.mxu0 0.0
    %1231 = vmatprep.subr.mxu0 0.0
    %1232 = vmatpush2.msra.mxu0 0.0
    %1233 = vmatprep.subr.mxu0 0.0
    %1234 = vmatpush2.msra.mxu0 0.0
    %1235 = vmatprep.subr.mxu0 0.0
    %1236 = vmatpush2.msra.mxu0 0.0
    %1237 = vmatprep.subr.mxu0 0.0
    %1238 = vmatpush2.msra.mxu0 0.0
    %1239 = vmatprep.subr.mxu0 0.0
    %1240 = vmatpush2.msra.mxu0 0.0
    %1241 = vmatprep.subr.mxu0 0.0
    %1242 = vmatpush2.msra.mxu0 0.0
    %1243 = vmatprep.subr.mxu0 0.0
    %1244 = vmatpush2.msra.mxu0 0.0
    %1245 = vmatprep.subr.mxu0 0.0
    %1246 = vmatpush2.msra.mxu0 0.0
    %1247 = vmatprep.subr.mxu0 0.0
    %1248 = vmatpush2.msra.mxu0 0.0
    %1249 = vmatprep.subr.mxu0 0.0
    %1250 = vmatpush2.msra.mxu0 0.0
    %1251 = vmatprep.subr.mxu0 0.0
    %1252 = vmatpush2.msra.mxu0 0.0
    %1253 = vmatprep.subr.mxu0 0.0
    %1254 = vmatpush2.msra.mxu0 0.0
    %1255 = vmatprep.mubr.f32.mxu0 0.0
    %1256 = vmatmul.mubr.f32.gmra.mxu0 %v1186
    %v1257 = vpop.f32.mrf.mxu0
    %v1258 = vadd.f32 0.0, %v1257
    %v1259 = vpop.f32.mrf.mxu0
    %1260 = vmatprep.mubr.f32.mxu0 0.0
    %1261 = vmatmul.mubr.f32.gmra.mxu0 %v1189
    %v1262 = vpop.f32.mrf.mxu0
    %v1263 = vadd.f32 0.0, %v1262
    %v1264 = vpop.f32.mrf.mxu0
    %1265 = vdwg.mxu0
    %v1267 = vsel %vm99, %v1165, 0
    %v1270 = vsel %vm99, %v1166, 0
    %1272 = vmatprep.subr.mxu0 0.0
    %1273 = vmatpush1.msra.mxu0 0.0
    %1274 = vmatprep.subr.mxu0 0.0
    %1275 = vmatpush1.msra.mxu0 0.0
    %1276 = vmatprep.subr.mxu0 0.0
    %1277 = vmatpush1.msra.mxu0 0.0
    %1278 = vmatprep.subr.mxu0 0.0
    %1279 = vmatpush1.msra.mxu0 0.0
    %1280 = vmatprep.subr.mxu0 0.0
    %1281 = vmatpush1.msra.mxu0 0.0
    %1282 = vmatprep.subr.mxu0 0.0
    %1283 = vmatpush1.msra.mxu0 0.0
    %1284 = vmatprep.subr.mxu0 0.0
    %1285 = vmatpush1.msra.mxu0 0.0
    %1286 = vmatprep.subr.mxu0 0.0
    %1287 = vmatpush1.msra.mxu0 0.0
    %1288 = vmatprep.subr.mxu0 0.0
    %1289 = vmatpush1.msra.mxu0 %v1176
    %1290 = vmatprep.subr.mxu0 0.0
    %1291 = vmatpush1.msra.mxu0 %v1175
    %1292 = vmatprep.subr.mxu0 0.0
    %1293 = vmatpush1.msra.mxu0 %v1174
    %1294 = vmatprep.subr.mxu0 0.0
    %1295 = vmatpush1.msra.mxu0 %v1173
    %1296 = vmatprep.subr.mxu0 0.0
    %1297 = vmatpush1.msra.mxu0 %v1172
    %1298 = vmatprep.subr.mxu0 0.0
    %1299 = vmatpush1.msra.mxu0 %v1171
    %1300 = vmatprep.subr.mxu0 0.0
    %1301 = vmatpush1.msra.mxu0 %v1170
    %1302 = vmatprep.subr.mxu0 0.0
    %1303 = vmatpush1.msra.mxu0 %v1169
    %1304 = vmatprep.subr.mxu0 0.0
    %1305 = vmatpush2.msra.mxu0 0.0
    %1306 = vmatprep.subr.mxu0 0.0
    %1307 = vmatpush2.msra.mxu0 0.0
    %1308 = vmatprep.subr.mxu0 0.0
    %1309 = vmatpush2.msra.mxu0 0.0
    %1310 = vmatprep.subr.mxu0 0.0
    %1311 = vmatpush2.msra.mxu0 0.0
    %1312 = vmatprep.subr.mxu0 0.0
    %1313 = vmatpush2.msra.mxu0 0.0
    %1314 = vmatprep.subr.mxu0 0.0
    %1315 = vmatpush2.msra.mxu0 0.0
    %1316 = vmatprep.subr.mxu0 0.0
    %1317 = vmatpush2.msra.mxu0 0.0
    %1318 = vmatprep.subr.mxu0 0.0
    %1319 = vmatpush2.msra.mxu0 0.0
    %1320 = vmatprep.subr.mxu0 0.0
    %1321 = vmatpush2.msra.mxu0 0.0
    %1322 = vmatprep.subr.mxu0 0.0
    %1323 = vmatpush2.msra.mxu0 0.0
    %1324 = vmatprep.subr.mxu0 0.0
    %1325 = vmatpush2.msra.mxu0 0.0
    %1326 = vmatprep.subr.mxu0 0.0
    %1327 = vmatpush2.msra.mxu0 0.0
    %1328 = vmatprep.subr.mxu0 0.0
    %1329 = vmatpush2.msra.mxu0 0.0
    %1330 = vmatprep.subr.mxu0 0.0
    %1331 = vmatpush2.msra.mxu0 0.0
    %1332 = vmatprep.subr.mxu0 0.0
    %1333 = vmatpush2.msra.mxu0 0.0
    %1334 = vmatprep.subr.mxu0 0.0
    %1335 = vmatpush2.msra.mxu0 0.0
    %1336 = vmatprep.mubr.f32.mxu0 0.0
    %1337 = vmatmul.mubr.f32.gmra.mxu0 %v1267
    %v1338 = vpop.f32.mrf.mxu0
    %v1339 = vadd.f32 %v1258, %v1338
    %v1340 = vpop.f32.mrf.mxu0
    %1341 = vmatprep.mubr.f32.mxu0 0.0
    %1342 = vmatmul.mubr.f32.gmra.mxu0 %v1270
    %v1343 = vpop.f32.mrf.mxu0
    %v1344 = vadd.f32 %v1263, %v1343
    %v1345 = vpop.f32.mrf.mxu0
    %1346 = vdwg.mxu0
    %v1347 = vlaneseq
    %v1348 = vshrl.u32 %v1347, 7
    %v1349 = vsub.s32 3, %v1348
    %v1350 = vrot.slane %v60, %v1349
    %v1351 = vadd.f32 %v1339, %v1350
    %v1352 = vadd.f32 %v1344, %v1350
    %v1353 = vmax.f32 %v1351, 0.0
    %v1354 = vmax.f32 %v1352, 0.0
    %v1355 = vld [vmem:[#allocation4] sm:$0xff]
    %v1356 = vld [vmem:[#allocation4 + $0x8] sm:$0xff]
    %v1357 = vld [vmem:[#allocation4 + $0x10] sm:$0xff]
    %v1358 = vld [vmem:[#allocation4 + $0x18] sm:$0xff]
    %v1359 = vld [vmem:[#allocation4 + $0x20] sm:$0xff]
    %v1360 = vld [vmem:[#allocation4 + $0x28] sm:$0xff]
    %v1361 = vld [vmem:[#allocation4 + $0x30] sm:$0xff]
    %v1362 = vld [vmem:[#allocation4 + $0x38] sm:$0xff]
    %v1363 = vld [vmem:[#allocation4 + $0x40] sm:$0xff]
    %v1364 = vld [vmem:[#allocation4 + $0x48] sm:$0xff]
    %v1365 = vld [vmem:[#allocation4 + $0x50] sm:$0xff]
    %v1366 = vld [vmem:[#allocation4 + $0x58] sm:$0xff]
    %v1367 = vld [vmem:[#allocation4 + $0x60] sm:$0xff]
    %v1368 = vld [vmem:[#allocation4 + $0x68] sm:$0xff]
    %v1369 = vld [vmem:[#allocation4 + $0x70] sm:$0xff]
    %v1370 = vld [vmem:[#allocation4 + $0x78] sm:$0xff]
    %v1371 = vld [vmem:[#allocation4 + $0x80] sm:$0xff]
    %v1372 = vld [vmem:[#allocation4 + $0x88] sm:$0xff]
    %v1373 = vld [vmem:[#allocation4 + $0x90] sm:$0xff]
    %v1374 = vld [vmem:[#allocation4 + $0x98] sm:$0xff]
    %v1375 = vld [vmem:[#allocation4 + $0xa0] sm:$0xff]
    %v1376 = vld [vmem:[#allocation4 + $0xa8] sm:$0xff]
    %v1377 = vld [vmem:[#allocation4 + $0xb0] sm:$0xff]
    %v1378 = vld [vmem:[#allocation4 + $0xb8] sm:$0xff]
    %v1379 = vld [vmem:[#allocation4 + $0xc0] sm:$0xff]
    %v1380 = vld [vmem:[#allocation4 + $0xc8] sm:$0xff]
    %v1381 = vld [vmem:[#allocation4 + $0xd0] sm:$0xff]
    %v1382 = vld [vmem:[#allocation4 + $0xd8] sm:$0xff]
    %v1383 = vld [vmem:[#allocation4 + $0xe0] sm:$0xff]
    %v1384 = vld [vmem:[#allocation4 + $0xe8] sm:$0xff]
    %v1385 = vld [vmem:[#allocation4 + $0xf0] sm:$0xff]
    %v1386 = vld [vmem:[#allocation4 + $0xf8] sm:$0xff]
    %v1387 = vld [vmem:[#allocation4 + $0x100] sm:$0xff]
    %v1388 = vld [vmem:[#allocation4 + $0x108] sm:$0xff]
    %v1389 = vld [vmem:[#allocation4 + $0x110] sm:$0xff]
    %v1390 = vld [vmem:[#allocation4 + $0x118] sm:$0xff]
    %v1391 = vld [vmem:[#allocation4 + $0x120] sm:$0xff]
    %v1392 = vld [vmem:[#allocation4 + $0x128] sm:$0xff]
    %v1393 = vld [vmem:[#allocation4 + $0x130] sm:$0xff]
    %v1394 = vld [vmem:[#allocation4 + $0x138] sm:$0xff]
    %v1395 = vld [vmem:[#allocation4 + $0x140] sm:$0xff]
    %v1396 = vld [vmem:[#allocation4 + $0x148] sm:$0xff]
    %v1397 = vld [vmem:[#allocation4 + $0x150] sm:$0xff]
    %v1398 = vld [vmem:[#allocation4 + $0x158] sm:$0xff]
    %v1399 = vld [vmem:[#allocation4 + $0x160] sm:$0xff]
    %v1400 = vld [vmem:[#allocation4 + $0x168] sm:$0xff]
    %v1401 = vld [vmem:[#allocation4 + $0x170] sm:$0xff]
    %v1402 = vld [vmem:[#allocation4 + $0x178] sm:$0xff]
    %1403 = vmatprep.subr.mxu0 %v1401
    %1404 = vmatpush1.msra.mxu0 %v1400
    %1405 = vmatprep.subr.mxu0 %v1398
    %1406 = vmatpush1.msra.mxu0 %v1397
    %1407 = vmatprep.subr.mxu0 %v1395
    %1408 = vmatpush1.msra.mxu0 %v1394
    %1409 = vmatprep.subr.mxu0 %v1392
    %1410 = vmatpush1.msra.mxu0 %v1391
    %1411 = vmatprep.subr.mxu0 %v1389
    %1412 = vmatpush1.msra.mxu0 %v1388
    %1413 = vmatprep.subr.mxu0 %v1386
    %1414 = vmatpush1.msra.mxu0 %v1385
    %1415 = vmatprep.subr.mxu0 %v1383
    %1416 = vmatpush1.msra.mxu0 %v1382
    %1417 = vmatprep.subr.mxu0 %v1380
    %1418 = vmatpush1.msra.mxu0 %v1379
    %1419 = vmatprep.subr.mxu0 %v1377
    %1420 = vmatpush1.msra.mxu0 %v1376
    %1421 = vmatprep.subr.mxu0 %v1374
    %1422 = vmatpush1.msra.mxu0 %v1373
    %1423 = vmatprep.subr.mxu0 %v1371
    %1424 = vmatpush1.msra.mxu0 %v1370
    %1425 = vmatprep.subr.mxu0 %v1368
    %1426 = vmatpush1.msra.mxu0 %v1367
    %1427 = vmatprep.subr.mxu0 %v1365
    %1428 = vmatpush1.msra.mxu0 %v1364
    %1429 = vmatprep.subr.mxu0 %v1362
    %1430 = vmatpush1.msra.mxu0 %v1361
    %1431 = vmatprep.subr.mxu0 %v1359
    %1432 = vmatpush1.msra.mxu0 %v1358
    %1433 = vmatprep.subr.mxu0 %v1356
    %1434 = vmatpush1.msra.mxu0 %v1355
    %1435 = vmatprep.subr.mxu0 0.0
    %1436 = vmatpush2.msra.mxu0 0.0
    %1437 = vmatprep.subr.mxu0 0.0
    %1438 = vmatpush2.msra.mxu0 0.0
    %1439 = vmatprep.subr.mxu0 0.0
    %1440 = vmatpush2.msra.mxu0 0.0
    %1441 = vmatprep.subr.mxu0 0.0
    %1442 = vmatpush2.msra.mxu0 0.0
    %1443 = vmatprep.subr.mxu0 0.0
    %1444 = vmatpush2.msra.mxu0 0.0
    %1445 = vmatprep.subr.mxu0 0.0
    %1446 = vmatpush2.msra.mxu0 0.0
    %1447 = vmatprep.subr.mxu0 0.0
    %1448 = vmatpush2.msra.mxu0 0.0
    %1449 = vmatprep.subr.mxu0 0.0
    %1450 = vmatpush2.msra.mxu0 0.0
    %1451 = vmatprep.subr.mxu0 0.0
    %1452 = vmatpush2.msra.mxu0 0.0
    %1453 = vmatprep.subr.mxu0 0.0
    %1454 = vmatpush2.msra.mxu0 0.0
    %1455 = vmatprep.subr.mxu0 0.0
    %1456 = vmatpush2.msra.mxu0 0.0
    %1457 = vmatprep.subr.mxu0 0.0
    %1458 = vmatpush2.msra.mxu0 0.0
    %1459 = vmatprep.subr.mxu0 0.0
    %1460 = vmatpush2.msra.mxu0 0.0
    %1461 = vmatprep.subr.mxu0 0.0
    %1462 = vmatpush2.msra.mxu0 0.0
    %1463 = vmatprep.subr.mxu0 0.0
    %1464 = vmatpush2.msra.mxu0 0.0
    %1465 = vmatprep.subr.mxu0 0.0
    %1466 = vmatpush2.msra.mxu0 0.0
    %1467 = vmatprep.mubr.f32.mxu0 0.0
    %1468 = vmatmul.mubr.f32.gmra.mxu0 %v1353
    %v1469 = vpop.f32.mrf.mxu0
    %v1470 = vadd.f32 0.0, %v1469
    %v1471 = vpop.f32.mrf.mxu0
    %v1472 = vadd.f32 0.0, %v1471
    %1473 = vmatprep.mubr.f32.mxu0 0.0
    %1474 = vmatmul.mubr.f32.gmra.mxu0 %v1354
    %v1475 = vpop.f32.mrf.mxu0
    %v1476 = vadd.f32 0.0, %v1475
    %v1477 = vpop.f32.mrf.mxu0
    %v1478 = vadd.f32 0.0, %v1477
    %1479 = vdwg.mxu0
    %1480 = vmatprep.subr.mxu0 0.0
    %1481 = vmatpush1.msra.mxu0 %v1402
    %1482 = vmatprep.subr.mxu0 0.0
    %1483 = vmatpush1.msra.mxu0 %v1399
    %1484 = vmatprep.subr.mxu0 0.0
    %1485 = vmatpush1.msra.mxu0 %v1396
    %1486 = vmatprep.subr.mxu0 0.0
    %1487 = vmatpush1.msra.mxu0 %v1393
    %1488 = vmatprep.subr.mxu0 0.0
    %1489 = vmatpush1.msra.mxu0 %v1390
    %1490 = vmatprep.subr.mxu0 0.0
    %1491 = vmatpush1.msra.mxu0 %v1387
    %1492 = vmatprep.subr.mxu0 0.0
    %1493 = vmatpush1.msra.mxu0 %v1384
    %1494 = vmatprep.subr.mxu0 0.0
    %1495 = vmatpush1.msra.mxu0 %v1381
    %1496 = vmatprep.subr.mxu0 0.0
    %1497 = vmatpush1.msra.mxu0 %v1378
    %1498 = vmatprep.subr.mxu0 0.0
    %1499 = vmatpush1.msra.mxu0 %v1375
    %1500 = vmatprep.subr.mxu0 0.0
    %1501 = vmatpush1.msra.mxu0 %v1372
    %1502 = vmatprep.subr.mxu0 0.0
    %1503 = vmatpush1.msra.mxu0 %v1369
    %1504 = vmatprep.subr.mxu0 0.0
    %1505 = vmatpush1.msra.mxu0 %v1366
    %1506 = vmatprep.subr.mxu0 0.0
    %1507 = vmatpush1.msra.mxu0 %v1363
    %1508 = vmatprep.subr.mxu0 0.0
    %1509 = vmatpush1.msra.mxu0 %v1360
    %1510 = vmatprep.subr.mxu0 0.0
    %1511 = vmatpush1.msra.mxu0 %v1357
    %1512 = vmatprep.subr.mxu0 0.0
    %1513 = vmatpush2.msra.mxu0 0.0
    %1514 = vmatprep.subr.mxu0 0.0
    %1515 = vmatpush2.msra.mxu0 0.0
    %1516 = vmatprep.subr.mxu0 0.0
    %1517 = vmatpush2.msra.mxu0 0.0
    %1518 = vmatprep.subr.mxu0 0.0
    %1519 = vmatpush2.msra.mxu0 0.0
    %1520 = vmatprep.subr.mxu0 0.0
    %1521 = vmatpush2.msra.mxu0 0.0
    %1522 = vmatprep.subr.mxu0 0.0
    %1523 = vmatpush2.msra.mxu0 0.0
    %1524 = vmatprep.subr.mxu0 0.0
    %1525 = vmatpush2.msra.mxu0 0.0
    %1526 = vmatprep.subr.mxu0 0.0
    %1527 = vmatpush2.msra.mxu0 0.0
    %1528 = vmatprep.subr.mxu0 0.0
    %1529 = vmatpush2.msra.mxu0 0.0
    %1530 = vmatprep.subr.mxu0 0.0
    %1531 = vmatpush2.msra.mxu0 0.0
    %1532 = vmatprep.subr.mxu0 0.0
    %1533 = vmatpush2.msra.mxu0 0.0
    %1534 = vmatprep.subr.mxu0 0.0
    %1535 = vmatpush2.msra.mxu0 0.0
    %1536 = vmatprep.subr.mxu0 0.0
    %1537 = vmatpush2.msra.mxu0 0.0
    %1538 = vmatprep.subr.mxu0 0.0
    %1539 = vmatpush2.msra.mxu0 0.0
    %1540 = vmatprep.subr.mxu0 0.0
    %1541 = vmatpush2.msra.mxu0 0.0
    %1542 = vmatprep.subr.mxu0 0.0
    %1543 = vmatpush2.msra.mxu0 0.0
    %1544 = vmatprep.mubr.f32.mxu0 0.0
    %1545 = vmatmul.mubr.f32.gmra.mxu0 %v1353
    %v1546 = vpop.f32.mrf.mxu0
    %v1547 = vadd.f32 0.0, %v1546
    %v1548 = vpop.f32.mrf.mxu0
    %1549 = vmatprep.mubr.f32.mxu0 0.0
    %1550 = vmatmul.mubr.f32.gmra.mxu0 %v1354
    %v1551 = vpop.f32.mrf.mxu0
    %v1552 = vadd.f32 0.0, %v1551
    %v1553 = vpop.f32.mrf.mxu0
    %1554 = vdwg.mxu0
    %v1555 = vlaneseq
    %v1556 = vshrl.u32 %v1555, 7
    %v1557 = vadd.s32 %v1556, 8
    %vm1558 = vcmp.lt.s32.totalorder %v1556, 0
    %v1559 = vsub.s32 0, %v1556
    %v1560 = vsel %vm1558, %v1559, %v1556
    %v1561 = vshrl.u32 %v1560, 3
    %v1562 = vand.u32 %v1560, 7
    %v1563 = vsub.s32 0, %v1562
    %v1564 = vsel %vm1558, %v1563, %v1562
    %vm1565 = vcmp.lt.s32.totalorder %v1557, 0
    %v1566 = vsub.s32 0, %v1557
    %v1567 = vsel %vm1565, %v1566, %v1557
    %v1568 = vshrl.u32 %v1567, 3
    %v1569 = vand.u32 %v1567, 7
    %v1570 = vsub.s32 0, %v1569
    %v1571 = vsel %vm1565, %v1570, %v1569
    %vm1572 = vcmp.ne.s32.totalorder %v1564, 0
    %vm1573 = vcmp.ne.s32.totalorder %v1571, 0
    %vm1574 = vcmp.lt.s32.totalorder %v1564, 0
    %vm1575 = vcmp.lt.s32.totalorder %v1571, 0
    %vm1576 = vmand %vm1574, %vm1572
    %vm1577 = vmand %vm1575, %vm1573
    %v1578 = vadd.s32 %v1564, 8
    %v1579 = vadd.s32 %v1571, 8
    %v1580 = vsel %vm1576, %v1578, %v1564
    %v1581 = vsel %vm1577, %v1579, %v1571
    %vm1582 = vcmp.eq.s32.totalorder %v1580, 0
    %vm1583 = vcmp.eq.s32.totalorder %v1581, 0
    %vm1586 = vcmask 1040384
    %v1587 = vrot.slane %v1470, 7
    %v1588 = vrot.slane %v1476, 7
    %v1589 = vsel %vm1586, %v1587, %v1588
    %v1592 = vsel %vm1586, 0.0, %v1587
    %v1593 = vsel %vm1582, 1, 0
    %v1594 = vsel %vm1583, 1, 0
    %vm1595 = vcmp.eq.s32.totalorder %v1593, 1
    %vm1596 = vcmp.eq.s32.totalorder %v1594, 1
    %v1597 = vsel %vm1595, 0.0, %v1592
    %v1598 = vsel %vm1596, 0.0, %v1589
    %vm1599 = vcmp.eq.s32.totalorder %v1580, 7
    %vm1600 = vcmp.eq.s32.totalorder %v1581, 7
    %vm1603 = vcmask 1046528
    %v1604 = vrot.slane %v1547, 1
    %v1605 = vrot.slane %v1552, 1
    %v1606 = vsel %vm1603, %v1604, %v1605
    %v1609 = vsel %vm1603, %v1605, 0.0
    %v1610 = vsel %vm1599, 1, 0
    %v1611 = vsel %vm1600, 1, 0
    %vm1612 = vcmp.eq.s32.totalorder %v1610, 1
    %vm1613 = vcmp.eq.s32.totalorder %v1611, 1
    %v1614 = vsel %vm1612, 0.0, %v1606
    %v1615 = vsel %vm1613, 0.0, %v1609
    %v1616 = vlaneseq
    %v1617 = vshrl.u32 %v1616, 7
    %v1618 = vsub.s32 4, %v1617
    %v1619 = vrot.slane %v60, %v1618
    %v1620 = vadd.f32 %v1619, %v1472
    %v1621 = vadd.f32 %v1619, %v1478
    %v1622 = vadd.f32 %v1620, %v1597
    %v1623 = vadd.f32 %v1621, %v1598
    %v1624 = vadd.f32 %v1622, %v1614
    %v1625 = vadd.f32 %v1623, %v1615
    %v1626 = vrot.slane %v1624, 4
    %v1627 = vmax.f32 %v1624, %v1626
    %v1628 = vrot.slane %v1627, 2
    %v1629 = vmax.f32 %v1627, %v1628
    %v1630 = vrot.slane %v1629, 1
    %v1631 = vmax.f32 %v1629, %v1630
    %v1632 = vrot.slane %v1625, 4
    %v1633 = vmax.f32 %v1625, %v1632
    %v1634 = vrot.slane %v1633, 2
    %v1635 = vmax.f32 %v1633, %v1634
    %v1636 = vrot.slane %v1635, 1
    %v1637 = vmax.f32 %v1635, %v1636
    %v1638 = vld [vmem:[%s7] sm:$0xff]
    %v1639 = vld [vmem:[%s7 + $0x8] sm:$0xff]
    %v1640 = vld [vmem:[%s7 + $0x10] sm:$0xff]
    %v1641 = vld [vmem:[%s7 + $0x18] sm:$0xff]
    %v1642 = vld [vmem:[%s7 + $0x20] sm:$0xff]
    %v1643 = vld [vmem:[%s7 + $0x28] sm:$0xff]
    %v1644 = vld [vmem:[%s7 + $0x30] sm:$0xff]
    %v1645 = vld [vmem:[%s7 + $0x38] sm:$0xff]
    %v1646 = vld [vmem:[%s7 + $0x40] sm:$0xff]
    %v1647 = vld [vmem:[%s7 + $0x48] sm:$0xff]
    %v1648 = vld [vmem:[%s7 + $0x50] sm:$0xff]
    %v1649 = vld [vmem:[%s7 + $0x58] sm:$0xff]
    %v1650 = vld [vmem:[%s7 + $0x60] sm:$0xff]
    %v1651 = vld [vmem:[%s7 + $0x68] sm:$0xff]
    %v1652 = vld [vmem:[%s7 + $0x70] sm:$0xff]
    %v1653 = vld [vmem:[%s7 + $0x78] sm:$0xff]
    %v1654 = vlaneseq
    %v1655 = vshrl.u32 %v1654, 7
    %v1656 = vsub.s32 5, %v1655
    %v1657 = vrot.slane %v60, %v1656
    %vm1660 = vcmask 1041409
    %v1661 = vsel %vm1660, %v1637, %v1631
    %1663 = vmatprep.subr.mxu0 0.0
    %1664 = vmatpush1.msra.mxu0 %v1653
    %1665 = vmatprep.subr.mxu0 0.0
    %1666 = vmatpush1.msra.mxu0 %v1652
    %1667 = vmatprep.subr.mxu0 0.0
    %1668 = vmatpush1.msra.mxu0 %v1651
    %1669 = vmatprep.subr.mxu0 0.0
    %1670 = vmatpush1.msra.mxu0 %v1650
    %1671 = vmatprep.subr.mxu0 0.0
    %1672 = vmatpush1.msra.mxu0 %v1649
    %1673 = vmatprep.subr.mxu0 0.0
    %1674 = vmatpush1.msra.mxu0 %v1648
    %1675 = vmatprep.subr.mxu0 0.0
    %1676 = vmatpush1.msra.mxu0 %v1647
    %1677 = vmatprep.subr.mxu0 0.0
    %1678 = vmatpush1.msra.mxu0 %v1646
    %1679 = vmatprep.subr.mxu0 0.0
    %1680 = vmatpush1.msra.mxu0 %v1645
    %1681 = vmatprep.subr.mxu0 0.0
    %1682 = vmatpush1.msra.mxu0 %v1644
    %1683 = vmatprep.subr.mxu0 0.0
    %1684 = vmatpush1.msra.mxu0 %v1643
    %1685 = vmatprep.subr.mxu0 0.0
    %1686 = vmatpush1.msra.mxu0 %v1642
    %1687 = vmatprep.subr.mxu0 0.0
    %1688 = vmatpush1.msra.mxu0 %v1641
    %1689 = vmatprep.subr.mxu0 0.0
    %1690 = vmatpush1.msra.mxu0 %v1640
    %1691 = vmatprep.subr.mxu0 0.0
    %1692 = vmatpush1.msra.mxu0 %v1639
    %1693 = vmatprep.subr.mxu0 0.0
    %1694 = vmatpush1.msra.mxu0 %v1638
    %1695 = vmatprep.subr.mxu0 0.0
    %1696 = vmatpush2.msra.mxu0 0.0
    %1697 = vmatprep.subr.mxu0 0.0
    %1698 = vmatpush2.msra.mxu0 0.0
    %1699 = vmatprep.subr.mxu0 0.0
    %1700 = vmatpush2.msra.mxu0 0.0
    %1701 = vmatprep.subr.mxu0 0.0
    %1702 = vmatpush2.msra.mxu0 0.0
    %1703 = vmatprep.subr.mxu0 0.0
    %1704 = vmatpush2.msra.mxu0 0.0
    %1705 = vmatprep.subr.mxu0 0.0
    %1706 = vmatpush2.msra.mxu0 0.0
    %1707 = vmatprep.subr.mxu0 0.0
    %1708 = vmatpush2.msra.mxu0 0.0
    %1709 = vmatprep.subr.mxu0 0.0
    %1710 = vmatpush2.msra.mxu0 0.0
    %1711 = vmatprep.subr.mxu0 0.0
    %1712 = vmatpush2.msra.mxu0 0.0
    %1713 = vmatprep.subr.mxu0 0.0
    %1714 = vmatpush2.msra.mxu0 0.0
    %1715 = vmatprep.subr.mxu0 0.0
    %1716 = vmatpush2.msra.mxu0 0.0
    %1717 = vmatprep.subr.mxu0 0.0
    %1718 = vmatpush2.msra.mxu0 0.0
    %1719 = vmatprep.subr.mxu0 0.0
    %1720 = vmatpush2.msra.mxu0 0.0
    %1721 = vmatprep.subr.mxu0 0.0
    %1722 = vmatpush2.msra.mxu0 0.0
    %1723 = vmatprep.subr.mxu0 0.0
    %1724 = vmatpush2.msra.mxu0 0.0
    %1725 = vmatprep.subr.mxu0 0.0
    %1726 = vmatpush2.msra.mxu0 0.0
    %1727 = vmatprep.mubr.f32.mxu0 0.0
    %1728 = vmatmul.mubr.f32.gmra.mxu0 %v1661
    %v1729 = vpop.f32.mrf.mxu0
    %v1730 = vadd.f32 %v1657, %v1729
    %v1731 = vpop.f32.mrf.mxu0
    %1732 = vdwg.mxu0
    %v1733 = vmax.f32 %v1730, 0.0
    %1735 = vset.pattern.permute.xlu0 0
    %1736 = vperm.xlu0 %1735, %v60
    %v1737 = vpop.permute.xlu0 %1736
    %v1738 = vrot.slane %v60, 6
    %v1739 = vrot.slane %v1737, 7
    %v1741 = vsel %vm205, %v1738, 0
    %v1744 = vsel %vm205, %v1733, 0
    %1746 = vmatprep.subr.mxu0 0.0
    %1747 = vmatpush1.xpose.msra.mxu0 0.0
    %1748 = vmatprep.subr.mxu0 0.0
    %1749 = vmatpush1.xpose.msra.mxu0 0.0
    %1750 = vmatprep.subr.mxu0 0.0
    %1751 = vmatpush1.xpose.msra.mxu0 0.0
    %1752 = vmatprep.subr.mxu0 0.0
    %1753 = vmatpush1.xpose.msra.mxu0 0.0
    %1754 = vmatprep.subr.mxu0 0.0
    %1755 = vmatpush1.xpose.msra.mxu0 0.0
    %1756 = vmatprep.subr.mxu0 0.0
    %1757 = vmatpush1.xpose.msra.mxu0 0.0
    %1758 = vmatprep.subr.mxu0 0.0
    %1759 = vmatpush1.xpose.msra.mxu0 0.0
    %1760 = vmatprep.subr.mxu0 0.0
    %1761 = vmatpush1.xpose.msra.mxu0 0.0
    %1762 = vmatprep.subr.mxu0 0.0
    %1763 = vmatpush1.xpose.msra.mxu0 0.0
    %1764 = vmatprep.subr.mxu0 0.0
    %1765 = vmatpush1.xpose.msra.mxu0 0.0
    %1766 = vmatprep.subr.mxu0 0.0
    %1767 = vmatpush1.xpose.msra.mxu0 0.0
    %1768 = vmatprep.subr.mxu0 0.0
    %1769 = vmatpush1.xpose.msra.mxu0 0.0
    %1770 = vmatprep.subr.mxu0 0.0
    %1771 = vmatpush1.xpose.msra.mxu0 0.0
    %1772 = vmatprep.subr.mxu0 0.0
    %1773 = vmatpush1.xpose.msra.mxu0 0.0
    %1774 = vmatprep.subr.mxu0 0.0
    %1775 = vmatpush1.xpose.msra.mxu0 0.0
    %1776 = vmatprep.subr.mxu0 0.0
    %1777 = vmatpush1.xpose.msra.mxu0 %v1744
    %1778 = vmatprep.subr.mxu0 0.0
    %1779 = vmatpush2.xpose.msra.mxu0 0.0
    %1780 = vmatprep.subr.mxu0 0.0
    %1781 = vmatpush2.xpose.msra.mxu0 0.0
    %1782 = vmatprep.subr.mxu0 0.0
    %1783 = vmatpush2.xpose.msra.mxu0 0.0
    %1784 = vmatprep.subr.mxu0 0.0
    %1785 = vmatpush2.xpose.msra.mxu0 0.0
    %1786 = vmatprep.subr.mxu0 0.0
    %1787 = vmatpush2.xpose.msra.mxu0 0.0
    %1788 = vmatprep.subr.mxu0 0.0
    %1789 = vmatpush2.xpose.msra.mxu0 0.0
    %1790 = vmatprep.subr.mxu0 0.0
    %1791 = vmatpush2.xpose.msra.mxu0 0.0
    %1792 = vmatprep.subr.mxu0 0.0
    %1793 = vmatpush2.xpose.msra.mxu0 0.0
    %1794 = vmatprep.subr.mxu0 0.0
    %1795 = vmatpush2.xpose.msra.mxu0 0.0
    %1796 = vmatprep.subr.mxu0 0.0
    %1797 = vmatpush2.xpose.msra.mxu0 0.0
    %1798 = vmatprep.subr.mxu0 0.0
    %1799 = vmatpush2.xpose.msra.mxu0 0.0
    %1800 = vmatprep.subr.mxu0 0.0
    %1801 = vmatpush2.xpose.msra.mxu0 0.0
    %1802 = vmatprep.subr.mxu0 0.0
    %1803 = vmatpush2.xpose.msra.mxu0 0.0
    %1804 = vmatprep.subr.mxu0 0.0
    %1805 = vmatpush2.xpose.msra.mxu0 0.0
    %1806 = vmatprep.subr.mxu0 0.0
    %1807 = vmatpush2.xpose.msra.mxu0 0.0
    %1808 = vmatprep.subr.mxu0 0.0
    %1809 = vmatpush2.xpose.msra.mxu0 0.0
    %1810 = vmatprep.mubr.f32.mxu0 0.0
    %1811 = vmatmul.mubr.f32.gmra.mxu0 %v1741
    %v1812 = vpop.f32.mrf.mxu0
    %v1813 = vadd.f32 %v1739, %v1812
    %v1814 = vpop.f32.mrf.mxu0
    %1815 = vdwg.mxu0
    %vm1816 = vcmask 15360
    %v1817 = vsel %vm1816, %v1813, 0.0
    %1818 = vst [vmem:[%s9] sm:$0x1] %v1817
    // Predicated region
    $region46: #{compagg_forward.1} parent=1 // pred_check
      _
    $region47: #{compagg_forward.1} parent=1 // pred_check_branch
      %1820 = sbr.rel (0) target = $region49
    $region48: #{compagg_forward.1} parent=1 // pred_region
      _
    $region49: #{compagg_forward.1} parent=1 // pred_fallthru
      _
    // Predicated region
    $region50: #{compagg_forward.1} parent=1 // pred_check
      _
    $region51: #{compagg_forward.1} parent=1 // pred_check_branch
      %1822 = sbr.rel (0) target = $region53
    $region52: #{compagg_forward.1} parent=1 // pred_region
      _
    $region53: #{compagg_forward.1} parent=1 // pred_fallthru
      _
    %1823 = vsyncpa [#allocation3], 1
    %1824 = vsyncpa [#allocation5], 1

</llo_original>
